<compile_context>
chip_gen: v7x
topology: tpu7x:2x2x1
jax: 0.10.0
libtpu: 0.0.40
codegen_flags: <defaults>
</compile_context>

<pallas_src>
import jax
import jax.numpy as jnp
from jax.experimental import pallas as pl
from jax.experimental.pallas import tpu as pltpu


def critic_kernel(w1_ref, b1_ref, w2_ref, b2_ref, x_ref, o_ref):
    # w1: SMEM [n_hid, n_in]   b1: SMEM [n_hid]
    # w2: SMEM [n_out, n_hid]  b2: SMEM [n_out]
    # x : VMEM [n_in,  TB]     o : VMEM [n_out, TB]   (batch on the lane axis)
    n_hid, n_in = w1_ref.shape
    n_out = w2_ref.shape[0]

    # Load each feature row once: [1, TB] lane vectors.
    xrows = [x_ref[k:k + 1, :] for k in range(n_in)]

    # Layer 1 (Linear + ReLU) and Layer 2 (Linear) as pure-VPU scalar*vector
    # FMAs; hidden rows are consumed immediately so nothing large stays live.
    accs = [None] * n_out
    for j in range(n_hid):
        hj = xrows[0] * w1_ref[j, 0]
        for k in range(1, n_in):
            hj = hj + xrows[k] * w1_ref[j, k]
        hj = jnp.maximum(hj + b1_ref[j], 0.0)          # ReLU
        for o in range(n_out):
            t = hj * w2_ref[o, j]
            accs[o] = t if accs[o] is None else accs[o] + t

    for o in range(n_out):
        o_ref[o:o + 1, :] = (accs[o] + b2_ref[o]).astype(o_ref.dtype)


def critic_forward(x, w1, b1, w2, b2, *, lane_tile=256):
    """x: [B, n_in] (PyTorch convention). Returns [B, n_out]."""
    B, n_in = x.shape
    n_hid = w1.shape[0]
    n_out = w2.shape[0]

    # Batch on the lane axis; pad to a multiple of the lane tile (>=128).
    b_pad = ((B + lane_tile - 1) // lane_tile) * lane_tile
    xT = x.T                                            # [n_in, B] (wrapper-side plumbing)
    if b_pad != B:
        xT = jnp.pad(xT, ((0, 0), (0, b_pad - B)))

    smem = lambda: pl.BlockSpec(memory_space=pltpu.MemorySpace.SMEM)
    out_T = pl.pallas_call(
        critic_kernel,
        out_shape=jax.ShapeDtypeStruct((n_out, b_pad), x.dtype),
        grid=(b_pad // lane_tile,),
        in_specs=[
            smem(),  # w1
            smem(),  # b1
            smem(),  # w2
            smem(),  # b2
            pl.BlockSpec((n_in, lane_tile), lambda i: (0, i)),   # x tile
        ],
        out_specs=pl.BlockSpec((n_out, lane_tile), lambda i: (0, i)),
        compiler_params=pltpu.CompilerParams(
            dimension_semantics=("parallel",)),   # shards batch tiles across v7x's 2 TCs
    )(w1, b1, w2, b2, xT)

    return out_T[:, :B].T                                # back to [B, n_out]


def critic_advantage(t1, t2, rwd, discount, done, w1, b1, w2, b2):
    # TD-error glue: both critic evaluations fused into ONE kernel launch by
    # concatenating the state batches along the batch axis.
    n1 = t1.shape[0]
    v = critic_forward(jnp.concatenate([t1, t2], axis=0), w1, b1, w2, b2)
    v1, v2 = v[:n1], v[n1:]
    v2 = jnp.where(done, 0.0, v2)
    # TODO(synk): .detach() on V(s') is autograd semantics; forward-only here.
    return rwd + discount * v2 - v1


def critic_reference(x, w1, b1, w2, b2):
    h = jnp.maximum(x @ w1.T + b1, 0.0)
    return h @ w2.T + b2


if __name__ == "__main__":
    n_inputs, n_hiddens, n_outputs = 4, 20, 1
    batch = 512   # lane-dense: batch sits on the 128-wide lane axis

    key = jax.random.PRNGKey(0)
    kx, k1, k2, k3, k4 = jax.random.split(key, 5)

    # Deterministic PyTorch-style (uniform +/- 1/sqrt(fan_in)) initialization.
    bound1 = 1.0 / jnp.sqrt(n_inputs)
    bound2 = 1.0 / jnp.sqrt(n_hiddens)
    w1 = jax.random.uniform(k1, (n_hiddens, n_inputs), jnp.float32, -bound1, bound1)
    b1 = jax.random.uniform(k2, (n_hiddens,), jnp.float32, -bound1, bound1)
    w2 = jax.random.uniform(k3, (n_outputs, n_hiddens), jnp.float32, -bound2, bound2)
    b2 = jax.random.uniform(k4, (n_outputs,), jnp.float32, -bound2, bound2)

    x = jax.random.normal(kx, (batch, n_inputs), jnp.float32)

    out = jax.block_until_ready(critic_forward(x, w1, b1, w2, b2))
    ref = critic_reference(x, w1, b1, w2, b2)
    assert out.shape == (batch, n_outputs)
    assert jnp.allclose(out, ref, atol=1e-5, rtol=1e-5)

    # Non-multiple-of-128 batch exercises the padding path.
    out_small = jax.block_until_ready(critic_forward(x[:8], w1, b1, w2, b2))
    assert jnp.allclose(out_small, ref[:8], atol=1e-5, rtol=1e-5)

    # Fused advantage() (both forward passes in one pallas_call).
    t1, t2 = x[:128], x[128:256]
    td = jax.block_until_ready(
        critic_advantage(t1, t2, rwd=1.0, discount=0.99, done=False,
                         w1=w1, b1=b1, w2=w2, b2=b2))
    td_ref = (1.0 + 0.99 * critic_reference(t2, w1, b1, w2, b2)
              - critic_reference(t1, w1, b1, w2, b2))
    assert jnp.allclose(td, td_ref, atol=1e-5, rtol=1e-5)

    print("KERNEL_OK")
</pallas_src>

<mosaic_0001>
module attributes {stable_mosaic.version = 11 : i64} {
  func.func @critic_kernel(%arg0: i32, %arg1: memref<20x4xf32, #tpu.memory_space<smem>>, %arg2: memref<20xf32, #tpu.memory_space<smem>>, %arg3: memref<1x20xf32, #tpu.memory_space<smem>>, %arg4: memref<1xf32, #tpu.memory_space<smem>>, %arg5: memref<4x256xf32, #tpu.memory_space<vmem>>, %arg6: memref<1x256xf32, #tpu.memory_space<vmem>>) attributes {dimension_semantics = [#tpu.dimension_semantics<parallel>], iteration_bounds = array<i64: 2>, scalar_prefetch = 0 : i64, scratch_operands = 0 : i64, tpu.core_type = #tpu.core_type<tc>, window_params = [{transform_indices = @transform_0, window_bounds = array<i64: 20, 4>}, {transform_indices = @transform_1, window_bounds = array<i64: 20>}, {transform_indices = @transform_2, window_bounds = array<i64: 1, 20>}, {transform_indices = @transform_3, window_bounds = array<i64: 1>}, {transform_indices = @transform_4, window_bounds = array<i64: 4, 256>}, {transform_indices = @transform_5, window_bounds = array<i64: 1, 256>}]} {
    %c0 = arith.constant 0 : index
    %c0_0 = arith.constant 0 : index
    %0 = vector.load %arg5[%c0, %c0_0] : memref<4x256xf32, #tpu.memory_space<vmem>>, vector<1x256xf32>
    %c1 = arith.constant 1 : index
    %c0_1 = arith.constant 0 : index
    %1 = vector.load %arg5[%c1, %c0_1] : memref<4x256xf32, #tpu.memory_space<vmem>>, vector<1x256xf32>
    %c2 = arith.constant 2 : index
    %c0_2 = arith.constant 0 : index
    %2 = vector.load %arg5[%c2, %c0_2] : memref<4x256xf32, #tpu.memory_space<vmem>>, vector<1x256xf32>
    %c3 = arith.constant 3 : index
    %c0_3 = arith.constant 0 : index
    %3 = vector.load %arg5[%c3, %c0_3] : memref<4x256xf32, #tpu.memory_space<vmem>>, vector<1x256xf32>
    %c0_4 = arith.constant 0 : index
    %c0_5 = arith.constant 0 : index
    %4 = memref.load %arg1[%c0_4, %c0_5] : memref<20x4xf32, #tpu.memory_space<smem>>
    %5 = vector.broadcast %4 : f32 to vector<1x256xf32>
    %6 = arith.mulf %0, %5 : vector<1x256xf32>
    %c0_6 = arith.constant 0 : index
    %c1_7 = arith.constant 1 : index
    %7 = memref.load %arg1[%c0_6, %c1_7] : memref<20x4xf32, #tpu.memory_space<smem>>
    %8 = vector.broadcast %7 : f32 to vector<1x256xf32>
    %9 = arith.mulf %1, %8 : vector<1x256xf32>
    %10 = arith.addf %6, %9 : vector<1x256xf32>
    %c0_8 = arith.constant 0 : index
    %c2_9 = arith.constant 2 : index
    %11 = memref.load %arg1[%c0_8, %c2_9] : memref<20x4xf32, #tpu.memory_space<smem>>
    %12 = vector.broadcast %11 : f32 to vector<1x256xf32>
    %13 = arith.mulf %2, %12 : vector<1x256xf32>
    %14 = arith.addf %10, %13 : vector<1x256xf32>
    %c0_10 = arith.constant 0 : index
    %c3_11 = arith.constant 3 : index
    %15 = memref.load %arg1[%c0_10, %c3_11] : memref<20x4xf32, #tpu.memory_space<smem>>
    %16 = vector.broadcast %15 : f32 to vector<1x256xf32>
    %17 = arith.mulf %3, %16 : vector<1x256xf32>
    %18 = arith.addf %14, %17 : vector<1x256xf32>
    %c0_12 = arith.constant 0 : index
    %19 = memref.load %arg2[%c0_12] : memref<20xf32, #tpu.memory_space<smem>>
    %20 = vector.broadcast %19 : f32 to vector<1x256xf32>
    %21 = arith.addf %18, %20 : vector<1x256xf32>
    %cst = arith.constant 0.000000e+00 : f32
    %22 = vector.broadcast %cst : f32 to vector<1x256xf32>
    %23 = arith.maximumf %21, %22 : vector<1x256xf32>
    %c0_13 = arith.constant 0 : index
    %c0_14 = arith.constant 0 : index
    %24 = memref.load %arg3[%c0_13, %c0_14] : memref<1x20xf32, #tpu.memory_space<smem>>
    %25 = vector.broadcast %24 : f32 to vector<1x256xf32>
    %26 = arith.mulf %23, %25 : vector<1x256xf32>
    %c1_15 = arith.constant 1 : index
    %c0_16 = arith.constant 0 : index
    %27 = memref.load %arg1[%c1_15, %c0_16] : memref<20x4xf32, #tpu.memory_space<smem>>
    %28 = vector.broadcast %27 : f32 to vector<1x256xf32>
    %29 = arith.mulf %0, %28 : vector<1x256xf32>
    %c1_17 = arith.constant 1 : index
    %c1_18 = arith.constant 1 : index
    %30 = memref.load %arg1[%c1_17, %c1_18] : memref<20x4xf32, #tpu.memory_space<smem>>
    %31 = vector.broadcast %30 : f32 to vector<1x256xf32>
    %32 = arith.mulf %1, %31 : vector<1x256xf32>
    %33 = arith.addf %29, %32 : vector<1x256xf32>
    %c1_19 = arith.constant 1 : index
    %c2_20 = arith.constant 2 : index
    %34 = memref.load %arg1[%c1_19, %c2_20] : memref<20x4xf32, #tpu.memory_space<smem>>
    %35 = vector.broadcast %34 : f32 to vector<1x256xf32>
    %36 = arith.mulf %2, %35 : vector<1x256xf32>
    %37 = arith.addf %33, %36 : vector<1x256xf32>
    %c1_21 = arith.constant 1 : index
    %c3_22 = arith.constant 3 : index
    %38 = memref.load %arg1[%c1_21, %c3_22] : memref<20x4xf32, #tpu.memory_space<smem>>
    %39 = vector.broadcast %38 : f32 to vector<1x256xf32>
    %40 = arith.mulf %3, %39 : vector<1x256xf32>
    %41 = arith.addf %37, %40 : vector<1x256xf32>
    %c1_23 = arith.constant 1 : index
    %42 = memref.load %arg2[%c1_23] : memref<20xf32, #tpu.memory_space<smem>>
    %43 = vector.broadcast %42 : f32 to vector<1x256xf32>
    %44 = arith.addf %41, %43 : vector<1x256xf32>
    %cst_24 = arith.constant 0.000000e+00 : f32
    %45 = vector.broadcast %cst_24 : f32 to vector<1x256xf32>
    %46 = arith.maximumf %44, %45 : vector<1x256xf32>
    %c0_25 = arith.constant 0 : index
    %c1_26 = arith.constant 1 : index
    %47 = memref.load %arg3[%c0_25, %c1_26] : memref<1x20xf32, #tpu.memory_space<smem>>
    %48 = vector.broadcast %47 : f32 to vector<1x256xf32>
    %49 = arith.mulf %46, %48 : vector<1x256xf32>
    %50 = arith.addf %26, %49 : vector<1x256xf32>
    %c2_27 = arith.constant 2 : index
    %c0_28 = arith.constant 0 : index
    %51 = memref.load %arg1[%c2_27, %c0_28] : memref<20x4xf32, #tpu.memory_space<smem>>
    %52 = vector.broadcast %51 : f32 to vector<1x256xf32>
    %53 = arith.mulf %0, %52 : vector<1x256xf32>
    %c2_29 = arith.constant 2 : index
    %c1_30 = arith.constant 1 : index
    %54 = memref.load %arg1[%c2_29, %c1_30] : memref<20x4xf32, #tpu.memory_space<smem>>
    %55 = vector.broadcast %54 : f32 to vector<1x256xf32>
    %56 = arith.mulf %1, %55 : vector<1x256xf32>
    %57 = arith.addf %53, %56 : vector<1x256xf32>
    %c2_31 = arith.constant 2 : index
    %c2_32 = arith.constant 2 : index
    %58 = memref.load %arg1[%c2_31, %c2_32] : memref<20x4xf32, #tpu.memory_space<smem>>
    %59 = vector.broadcast %58 : f32 to vector<1x256xf32>
    %60 = arith.mulf %2, %59 : vector<1x256xf32>
    %61 = arith.addf %57, %60 : vector<1x256xf32>
    %c2_33 = arith.constant 2 : index
    %c3_34 = arith.constant 3 : index
    %62 = memref.load %arg1[%c2_33, %c3_34] : memref<20x4xf32, #tpu.memory_space<smem>>
    %63 = vector.broadcast %62 : f32 to vector<1x256xf32>
    %64 = arith.mulf %3, %63 : vector<1x256xf32>
    %65 = arith.addf %61, %64 : vector<1x256xf32>
    %c2_35 = arith.constant 2 : index
    %66 = memref.load %arg2[%c2_35] : memref<20xf32, #tpu.memory_space<smem>>
    %67 = vector.broadcast %66 : f32 to vector<1x256xf32>
    %68 = arith.addf %65, %67 : vector<1x256xf32>
    %cst_36 = arith.constant 0.000000e+00 : f32
    %69 = vector.broadcast %cst_36 : f32 to vector<1x256xf32>
    %70 = arith.maximumf %68, %69 : vector<1x256xf32>
    %c0_37 = arith.constant 0 : index
    %c2_38 = arith.constant 2 : index
    %71 = memref.load %arg3[%c0_37, %c2_38] : memref<1x20xf32, #tpu.memory_space<smem>>
    %72 = vector.broadcast %71 : f32 to vector<1x256xf32>
    %73 = arith.mulf %70, %72 : vector<1x256xf32>
    %74 = arith.addf %50, %73 : vector<1x256xf32>
    %c3_39 = arith.constant 3 : index
    %c0_40 = arith.constant 0 : index
    %75 = memref.load %arg1[%c3_39, %c0_40] : memref<20x4xf32, #tpu.memory_space<smem>>
    %76 = vector.broadcast %75 : f32 to vector<1x256xf32>
    %77 = arith.mulf %0, %76 : vector<1x256xf32>
    %c3_41 = arith.constant 3 : index
    %c1_42 = arith.constant 1 : index
    %78 = memref.load %arg1[%c3_41, %c1_42] : memref<20x4xf32, #tpu.memory_space<smem>>
    %79 = vector.broadcast %78 : f32 to vector<1x256xf32>
    %80 = arith.mulf %1, %79 : vector<1x256xf32>
    %81 = arith.addf %77, %80 : vector<1x256xf32>
    %c3_43 = arith.constant 3 : index
    %c2_44 = arith.constant 2 : index
    %82 = memref.load %arg1[%c3_43, %c2_44] : memref<20x4xf32, #tpu.memory_space<smem>>
    %83 = vector.broadcast %82 : f32 to vector<1x256xf32>
    %84 = arith.mulf %2, %83 : vector<1x256xf32>
    %85 = arith.addf %81, %84 : vector<1x256xf32>
    %c3_45 = arith.constant 3 : index
    %c3_46 = arith.constant 3 : index
    %86 = memref.load %arg1[%c3_45, %c3_46] : memref<20x4xf32, #tpu.memory_space<smem>>
    %87 = vector.broadcast %86 : f32 to vector<1x256xf32>
    %88 = arith.mulf %3, %87 : vector<1x256xf32>
    %89 = arith.addf %85, %88 : vector<1x256xf32>
    %c3_47 = arith.constant 3 : index
    %90 = memref.load %arg2[%c3_47] : memref<20xf32, #tpu.memory_space<smem>>
    %91 = vector.broadcast %90 : f32 to vector<1x256xf32>
    %92 = arith.addf %89, %91 : vector<1x256xf32>
    %cst_48 = arith.constant 0.000000e+00 : f32
    %93 = vector.broadcast %cst_48 : f32 to vector<1x256xf32>
    %94 = arith.maximumf %92, %93 : vector<1x256xf32>
    %c0_49 = arith.constant 0 : index
    %c3_50 = arith.constant 3 : index
    %95 = memref.load %arg3[%c0_49, %c3_50] : memref<1x20xf32, #tpu.memory_space<smem>>
    %96 = vector.broadcast %95 : f32 to vector<1x256xf32>
    %97 = arith.mulf %94, %96 : vector<1x256xf32>
    %98 = arith.addf %74, %97 : vector<1x256xf32>
    %c4 = arith.constant 4 : index
    %c0_51 = arith.constant 0 : index
    %99 = memref.load %arg1[%c4, %c0_51] : memref<20x4xf32, #tpu.memory_space<smem>>
    %100 = vector.broadcast %99 : f32 to vector<1x256xf32>
    %101 = arith.mulf %0, %100 : vector<1x256xf32>
    %c4_52 = arith.constant 4 : index
    %c1_53 = arith.constant 1 : index
    %102 = memref.load %arg1[%c4_52, %c1_53] : memref<20x4xf32, #tpu.memory_space<smem>>
    %103 = vector.broadcast %102 : f32 to vector<1x256xf32>
    %104 = arith.mulf %1, %103 : vector<1x256xf32>
    %105 = arith.addf %101, %104 : vector<1x256xf32>
    %c4_54 = arith.constant 4 : index
    %c2_55 = arith.constant 2 : index
    %106 = memref.load %arg1[%c4_54, %c2_55] : memref<20x4xf32, #tpu.memory_space<smem>>
    %107 = vector.broadcast %106 : f32 to vector<1x256xf32>
    %108 = arith.mulf %2, %107 : vector<1x256xf32>
    %109 = arith.addf %105, %108 : vector<1x256xf32>
    %c4_56 = arith.constant 4 : index
    %c3_57 = arith.constant 3 : index
    %110 = memref.load %arg1[%c4_56, %c3_57] : memref<20x4xf32, #tpu.memory_space<smem>>
    %111 = vector.broadcast %110 : f32 to vector<1x256xf32>
    %112 = arith.mulf %3, %111 : vector<1x256xf32>
    %113 = arith.addf %109, %112 : vector<1x256xf32>
    %c4_58 = arith.constant 4 : index
    %114 = memref.load %arg2[%c4_58] : memref<20xf32, #tpu.memory_space<smem>>
    %115 = vector.broadcast %114 : f32 to vector<1x256xf32>
    %116 = arith.addf %113, %115 : vector<1x256xf32>
    %cst_59 = arith.constant 0.000000e+00 : f32
    %117 = vector.broadcast %cst_59 : f32 to vector<1x256xf32>
    %118 = arith.maximumf %116, %117 : vector<1x256xf32>
    %c0_60 = arith.constant 0 : index
    %c4_61 = arith.constant 4 : index
    %119 = memref.load %arg3[%c0_60, %c4_61] : memref<1x20xf32, #tpu.memory_space<smem>>
    %120 = vector.broadcast %119 : f32 to vector<1x256xf32>
    %121 = arith.mulf %118, %120 : vector<1x256xf32>
    %122 = arith.addf %98, %121 : vector<1x256xf32>
    %c5 = arith.constant 5 : index
    %c0_62 = arith.constant 0 : index
    %123 = memref.load %arg1[%c5, %c0_62] : memref<20x4xf32, #tpu.memory_space<smem>>
    %124 = vector.broadcast %123 : f32 to vector<1x256xf32>
    %125 = arith.mulf %0, %124 : vector<1x256xf32>
    %c5_63 = arith.constant 5 : index
    %c1_64 = arith.constant 1 : index
    %126 = memref.load %arg1[%c5_63, %c1_64] : memref<20x4xf32, #tpu.memory_space<smem>>
    %127 = vector.broadcast %126 : f32 to vector<1x256xf32>
    %128 = arith.mulf %1, %127 : vector<1x256xf32>
    %129 = arith.addf %125, %128 : vector<1x256xf32>
    %c5_65 = arith.constant 5 : index
    %c2_66 = arith.constant 2 : index
    %130 = memref.load %arg1[%c5_65, %c2_66] : memref<20x4xf32, #tpu.memory_space<smem>>
    %131 = vector.broadcast %130 : f32 to vector<1x256xf32>
    %132 = arith.mulf %2, %131 : vector<1x256xf32>
    %133 = arith.addf %129, %132 : vector<1x256xf32>
    %c5_67 = arith.constant 5 : index
    %c3_68 = arith.constant 3 : index
    %134 = memref.load %arg1[%c5_67, %c3_68] : memref<20x4xf32, #tpu.memory_space<smem>>
    %135 = vector.broadcast %134 : f32 to vector<1x256xf32>
    %136 = arith.mulf %3, %135 : vector<1x256xf32>
    %137 = arith.addf %133, %136 : vector<1x256xf32>
    %c5_69 = arith.constant 5 : index
    %138 = memref.load %arg2[%c5_69] : memref<20xf32, #tpu.memory_space<smem>>
    %139 = vector.broadcast %138 : f32 to vector<1x256xf32>
    %140 = arith.addf %137, %139 : vector<1x256xf32>
    %cst_70 = arith.constant 0.000000e+00 : f32
    %141 = vector.broadcast %cst_70 : f32 to vector<1x256xf32>
    %142 = arith.maximumf %140, %141 : vector<1x256xf32>
    %c0_71 = arith.constant 0 : index
    %c5_72 = arith.constant 5 : index
    %143 = memref.load %arg3[%c0_71, %c5_72] : memref<1x20xf32, #tpu.memory_space<smem>>
    %144 = vector.broadcast %143 : f32 to vector<1x256xf32>
    %145 = arith.mulf %142, %144 : vector<1x256xf32>
    %146 = arith.addf %122, %145 : vector<1x256xf32>
    %c6 = arith.constant 6 : index
    %c0_73 = arith.constant 0 : index
    %147 = memref.load %arg1[%c6, %c0_73] : memref<20x4xf32, #tpu.memory_space<smem>>
    %148 = vector.broadcast %147 : f32 to vector<1x256xf32>
    %149 = arith.mulf %0, %148 : vector<1x256xf32>
    %c6_74 = arith.constant 6 : index
    %c1_75 = arith.constant 1 : index
    %150 = memref.load %arg1[%c6_74, %c1_75] : memref<20x4xf32, #tpu.memory_space<smem>>
    %151 = vector.broadcast %150 : f32 to vector<1x256xf32>
    %152 = arith.mulf %1, %151 : vector<1x256xf32>
    %153 = arith.addf %149, %152 : vector<1x256xf32>
    %c6_76 = arith.constant 6 : index
    %c2_77 = arith.constant 2 : index
    %154 = memref.load %arg1[%c6_76, %c2_77] : memref<20x4xf32, #tpu.memory_space<smem>>
    %155 = vector.broadcast %154 : f32 to vector<1x256xf32>
    %156 = arith.mulf %2, %155 : vector<1x256xf32>
    %157 = arith.addf %153, %156 : vector<1x256xf32>
    %c6_78 = arith.constant 6 : index
    %c3_79 = arith.constant 3 : index
    %158 = memref.load %arg1[%c6_78, %c3_79] : memref<20x4xf32, #tpu.memory_space<smem>>
    %159 = vector.broadcast %158 : f32 to vector<1x256xf32>
    %160 = arith.mulf %3, %159 : vector<1x256xf32>
    %161 = arith.addf %157, %160 : vector<1x256xf32>
    %c6_80 = arith.constant 6 : index
    %162 = memref.load %arg2[%c6_80] : memref<20xf32, #tpu.memory_space<smem>>
    %163 = vector.broadcast %162 : f32 to vector<1x256xf32>
    %164 = arith.addf %161, %163 : vector<1x256xf32>
    %cst_81 = arith.constant 0.000000e+00 : f32
    %165 = vector.broadcast %cst_81 : f32 to vector<1x256xf32>
    %166 = arith.maximumf %164, %165 : vector<1x256xf32>
    %c0_82 = arith.constant 0 : index
    %c6_83 = arith.constant 6 : index
    %167 = memref.load %arg3[%c0_82, %c6_83] : memref<1x20xf32, #tpu.memory_space<smem>>
    %168 = vector.broadcast %167 : f32 to vector<1x256xf32>
    %169 = arith.mulf %166, %168 : vector<1x256xf32>
    %170 = arith.addf %146, %169 : vector<1x256xf32>
    %c7 = arith.constant 7 : index
    %c0_84 = arith.constant 0 : index
    %171 = memref.load %arg1[%c7, %c0_84] : memref<20x4xf32, #tpu.memory_space<smem>>
    %172 = vector.broadcast %171 : f32 to vector<1x256xf32>
    %173 = arith.mulf %0, %172 : vector<1x256xf32>
    %c7_85 = arith.constant 7 : index
    %c1_86 = arith.constant 1 : index
    %174 = memref.load %arg1[%c7_85, %c1_86] : memref<20x4xf32, #tpu.memory_space<smem>>
    %175 = vector.broadcast %174 : f32 to vector<1x256xf32>
    %176 = arith.mulf %1, %175 : vector<1x256xf32>
    %177 = arith.addf %173, %176 : vector<1x256xf32>
    %c7_87 = arith.constant 7 : index
    %c2_88 = arith.constant 2 : index
    %178 = memref.load %arg1[%c7_87, %c2_88] : memref<20x4xf32, #tpu.memory_space<smem>>
    %179 = vector.broadcast %178 : f32 to vector<1x256xf32>
    %180 = arith.mulf %2, %179 : vector<1x256xf32>
    %181 = arith.addf %177, %180 : vector<1x256xf32>
    %c7_89 = arith.constant 7 : index
    %c3_90 = arith.constant 3 : index
    %182 = memref.load %arg1[%c7_89, %c3_90] : memref<20x4xf32, #tpu.memory_space<smem>>
    %183 = vector.broadcast %182 : f32 to vector<1x256xf32>
    %184 = arith.mulf %3, %183 : vector<1x256xf32>
    %185 = arith.addf %181, %184 : vector<1x256xf32>
    %c7_91 = arith.constant 7 : index
    %186 = memref.load %arg2[%c7_91] : memref<20xf32, #tpu.memory_space<smem>>
    %187 = vector.broadcast %186 : f32 to vector<1x256xf32>
    %188 = arith.addf %185, %187 : vector<1x256xf32>
    %cst_92 = arith.constant 0.000000e+00 : f32
    %189 = vector.broadcast %cst_92 : f32 to vector<1x256xf32>
    %190 = arith.maximumf %188, %189 : vector<1x256xf32>
    %c0_93 = arith.constant 0 : index
    %c7_94 = arith.constant 7 : index
    %191 = memref.load %arg3[%c0_93, %c7_94] : memref<1x20xf32, #tpu.memory_space<smem>>
    %192 = vector.broadcast %191 : f32 to vector<1x256xf32>
    %193 = arith.mulf %190, %192 : vector<1x256xf32>
    %194 = arith.addf %170, %193 : vector<1x256xf32>
    %c8 = arith.constant 8 : index
    %c0_95 = arith.constant 0 : index
    %195 = memref.load %arg1[%c8, %c0_95] : memref<20x4xf32, #tpu.memory_space<smem>>
    %196 = vector.broadcast %195 : f32 to vector<1x256xf32>
    %197 = arith.mulf %0, %196 : vector<1x256xf32>
    %c8_96 = arith.constant 8 : index
    %c1_97 = arith.constant 1 : index
    %198 = memref.load %arg1[%c8_96, %c1_97] : memref<20x4xf32, #tpu.memory_space<smem>>
    %199 = vector.broadcast %198 : f32 to vector<1x256xf32>
    %200 = arith.mulf %1, %199 : vector<1x256xf32>
    %201 = arith.addf %197, %200 : vector<1x256xf32>
    %c8_98 = arith.constant 8 : index
    %c2_99 = arith.constant 2 : index
    %202 = memref.load %arg1[%c8_98, %c2_99] : memref<20x4xf32, #tpu.memory_space<smem>>
    %203 = vector.broadcast %202 : f32 to vector<1x256xf32>
    %204 = arith.mulf %2, %203 : vector<1x256xf32>
    %205 = arith.addf %201, %204 : vector<1x256xf32>
    %c8_100 = arith.constant 8 : index
    %c3_101 = arith.constant 3 : index
    %206 = memref.load %arg1[%c8_100, %c3_101] : memref<20x4xf32, #tpu.memory_space<smem>>
    %207 = vector.broadcast %206 : f32 to vector<1x256xf32>
    %208 = arith.mulf %3, %207 : vector<1x256xf32>
    %209 = arith.addf %205, %208 : vector<1x256xf32>
    %c8_102 = arith.constant 8 : index
    %210 = memref.load %arg2[%c8_102] : memref<20xf32, #tpu.memory_space<smem>>
    %211 = vector.broadcast %210 : f32 to vector<1x256xf32>
    %212 = arith.addf %209, %211 : vector<1x256xf32>
    %cst_103 = arith.constant 0.000000e+00 : f32
    %213 = vector.broadcast %cst_103 : f32 to vector<1x256xf32>
    %214 = arith.maximumf %212, %213 : vector<1x256xf32>
    %c0_104 = arith.constant 0 : index
    %c8_105 = arith.constant 8 : index
    %215 = memref.load %arg3[%c0_104, %c8_105] : memref<1x20xf32, #tpu.memory_space<smem>>
    %216 = vector.broadcast %215 : f32 to vector<1x256xf32>
    %217 = arith.mulf %214, %216 : vector<1x256xf32>
    %218 = arith.addf %194, %217 : vector<1x256xf32>
    %c9 = arith.constant 9 : index
    %c0_106 = arith.constant 0 : index
    %219 = memref.load %arg1[%c9, %c0_106] : memref<20x4xf32, #tpu.memory_space<smem>>
    %220 = vector.broadcast %219 : f32 to vector<1x256xf32>
    %221 = arith.mulf %0, %220 : vector<1x256xf32>
    %c9_107 = arith.constant 9 : index
    %c1_108 = arith.constant 1 : index
    %222 = memref.load %arg1[%c9_107, %c1_108] : memref<20x4xf32, #tpu.memory_space<smem>>
    %223 = vector.broadcast %222 : f32 to vector<1x256xf32>
    %224 = arith.mulf %1, %223 : vector<1x256xf32>
    %225 = arith.addf %221, %224 : vector<1x256xf32>
    %c9_109 = arith.constant 9 : index
    %c2_110 = arith.constant 2 : index
    %226 = memref.load %arg1[%c9_109, %c2_110] : memref<20x4xf32, #tpu.memory_space<smem>>
    %227 = vector.broadcast %226 : f32 to vector<1x256xf32>
    %228 = arith.mulf %2, %227 : vector<1x256xf32>
    %229 = arith.addf %225, %228 : vector<1x256xf32>
    %c9_111 = arith.constant 9 : index
    %c3_112 = arith.constant 3 : index
    %230 = memref.load %arg1[%c9_111, %c3_112] : memref<20x4xf32, #tpu.memory_space<smem>>
    %231 = vector.broadcast %230 : f32 to vector<1x256xf32>
    %232 = arith.mulf %3, %231 : vector<1x256xf32>
    %233 = arith.addf %229, %232 : vector<1x256xf32>
    %c9_113 = arith.constant 9 : index
    %234 = memref.load %arg2[%c9_113] : memref<20xf32, #tpu.memory_space<smem>>
    %235 = vector.broadcast %234 : f32 to vector<1x256xf32>
    %236 = arith.addf %233, %235 : vector<1x256xf32>
    %cst_114 = arith.constant 0.000000e+00 : f32
    %237 = vector.broadcast %cst_114 : f32 to vector<1x256xf32>
    %238 = arith.maximumf %236, %237 : vector<1x256xf32>
    %c0_115 = arith.constant 0 : index
    %c9_116 = arith.constant 9 : index
    %239 = memref.load %arg3[%c0_115, %c9_116] : memref<1x20xf32, #tpu.memory_space<smem>>
    %240 = vector.broadcast %239 : f32 to vector<1x256xf32>
    %241 = arith.mulf %238, %240 : vector<1x256xf32>
    %242 = arith.addf %218, %241 : vector<1x256xf32>
    %c10 = arith.constant 10 : index
    %c0_117 = arith.constant 0 : index
    %243 = memref.load %arg1[%c10, %c0_117] : memref<20x4xf32, #tpu.memory_space<smem>>
    %244 = vector.broadcast %243 : f32 to vector<1x256xf32>
    %245 = arith.mulf %0, %244 : vector<1x256xf32>
    %c10_118 = arith.constant 10 : index
    %c1_119 = arith.constant 1 : index
    %246 = memref.load %arg1[%c10_118, %c1_119] : memref<20x4xf32, #tpu.memory_space<smem>>
    %247 = vector.broadcast %246 : f32 to vector<1x256xf32>
    %248 = arith.mulf %1, %247 : vector<1x256xf32>
    %249 = arith.addf %245, %248 : vector<1x256xf32>
    %c10_120 = arith.constant 10 : index
    %c2_121 = arith.constant 2 : index
    %250 = memref.load %arg1[%c10_120, %c2_121] : memref<20x4xf32, #tpu.memory_space<smem>>
    %251 = vector.broadcast %250 : f32 to vector<1x256xf32>
    %252 = arith.mulf %2, %251 : vector<1x256xf32>
    %253 = arith.addf %249, %252 : vector<1x256xf32>
    %c10_122 = arith.constant 10 : index
    %c3_123 = arith.constant 3 : index
    %254 = memref.load %arg1[%c10_122, %c3_123] : memref<20x4xf32, #tpu.memory_space<smem>>
    %255 = vector.broadcast %254 : f32 to vector<1x256xf32>
    %256 = arith.mulf %3, %255 : vector<1x256xf32>
    %257 = arith.addf %253, %256 : vector<1x256xf32>
    %c10_124 = arith.constant 10 : index
    %258 = memref.load %arg2[%c10_124] : memref<20xf32, #tpu.memory_space<smem>>
    %259 = vector.broadcast %258 : f32 to vector<1x256xf32>
    %260 = arith.addf %257, %259 : vector<1x256xf32>
    %cst_125 = arith.constant 0.000000e+00 : f32
    %261 = vector.broadcast %cst_125 : f32 to vector<1x256xf32>
    %262 = arith.maximumf %260, %261 : vector<1x256xf32>
    %c0_126 = arith.constant 0 : index
    %c10_127 = arith.constant 10 : index
    %263 = memref.load %arg3[%c0_126, %c10_127] : memref<1x20xf32, #tpu.memory_space<smem>>
    %264 = vector.broadcast %263 : f32 to vector<1x256xf32>
    %265 = arith.mulf %262, %264 : vector<1x256xf32>
    %266 = arith.addf %242, %265 : vector<1x256xf32>
    %c11 = arith.constant 11 : index
    %c0_128 = arith.constant 0 : index
    %267 = memref.load %arg1[%c11, %c0_128] : memref<20x4xf32, #tpu.memory_space<smem>>
    %268 = vector.broadcast %267 : f32 to vector<1x256xf32>
    %269 = arith.mulf %0, %268 : vector<1x256xf32>
    %c11_129 = arith.constant 11 : index
    %c1_130 = arith.constant 1 : index
    %270 = memref.load %arg1[%c11_129, %c1_130] : memref<20x4xf32, #tpu.memory_space<smem>>
    %271 = vector.broadcast %270 : f32 to vector<1x256xf32>
    %272 = arith.mulf %1, %271 : vector<1x256xf32>
    %273 = arith.addf %269, %272 : vector<1x256xf32>
    %c11_131 = arith.constant 11 : index
    %c2_132 = arith.constant 2 : index
    %274 = memref.load %arg1[%c11_131, %c2_132] : memref<20x4xf32, #tpu.memory_space<smem>>
    %275 = vector.broadcast %274 : f32 to vector<1x256xf32>
    %276 = arith.mulf %2, %275 : vector<1x256xf32>
    %277 = arith.addf %273, %276 : vector<1x256xf32>
    %c11_133 = arith.constant 11 : index
    %c3_134 = arith.constant 3 : index
    %278 = memref.load %arg1[%c11_133, %c3_134] : memref<20x4xf32, #tpu.memory_space<smem>>
    %279 = vector.broadcast %278 : f32 to vector<1x256xf32>
    %280 = arith.mulf %3, %279 : vector<1x256xf32>
    %281 = arith.addf %277, %280 : vector<1x256xf32>
    %c11_135 = arith.constant 11 : index
    %282 = memref.load %arg2[%c11_135] : memref<20xf32, #tpu.memory_space<smem>>
    %283 = vector.broadcast %282 : f32 to vector<1x256xf32>
    %284 = arith.addf %281, %283 : vector<1x256xf32>
    %cst_136 = arith.constant 0.000000e+00 : f32
    %285 = vector.broadcast %cst_136 : f32 to vector<1x256xf32>
    %286 = arith.maximumf %284, %285 : vector<1x256xf32>
    %c0_137 = arith.constant 0 : index
    %c11_138 = arith.constant 11 : index
    %287 = memref.load %arg3[%c0_137, %c11_138] : memref<1x20xf32, #tpu.memory_space<smem>>
    %288 = vector.broadcast %287 : f32 to vector<1x256xf32>
    %289 = arith.mulf %286, %288 : vector<1x256xf32>
    %290 = arith.addf %266, %289 : vector<1x256xf32>
    %c12 = arith.constant 12 : index
    %c0_139 = arith.constant 0 : index
    %291 = memref.load %arg1[%c12, %c0_139] : memref<20x4xf32, #tpu.memory_space<smem>>
    %292 = vector.broadcast %291 : f32 to vector<1x256xf32>
    %293 = arith.mulf %0, %292 : vector<1x256xf32>
    %c12_140 = arith.constant 12 : index
    %c1_141 = arith.constant 1 : index
    %294 = memref.load %arg1[%c12_140, %c1_141] : memref<20x4xf32, #tpu.memory_space<smem>>
    %295 = vector.broadcast %294 : f32 to vector<1x256xf32>
    %296 = arith.mulf %1, %295 : vector<1x256xf32>
    %297 = arith.addf %293, %296 : vector<1x256xf32>
    %c12_142 = arith.constant 12 : index
    %c2_143 = arith.constant 2 : index
    %298 = memref.load %arg1[%c12_142, %c2_143] : memref<20x4xf32, #tpu.memory_space<smem>>
    %299 = vector.broadcast %298 : f32 to vector<1x256xf32>
    %300 = arith.mulf %2, %299 : vector<1x256xf32>
    %301 = arith.addf %297, %300 : vector<1x256xf32>
    %c12_144 = arith.constant 12 : index
    %c3_145 = arith.constant 3 : index
    %302 = memref.load %arg1[%c12_144, %c3_145] : memref<20x4xf32, #tpu.memory_space<smem>>
    %303 = vector.broadcast %302 : f32 to vector<1x256xf32>
    %304 = arith.mulf %3, %303 : vector<1x256xf32>
    %305 = arith.addf %301, %304 : vector<1x256xf32>
    %c12_146 = arith.constant 12 : index
    %306 = memref.load %arg2[%c12_146] : memref<20xf32, #tpu.memory_space<smem>>
    %307 = vector.broadcast %306 : f32 to vector<1x256xf32>
    %308 = arith.addf %305, %307 : vector<1x256xf32>
    %cst_147 = arith.constant 0.000000e+00 : f32
    %309 = vector.broadcast %cst_147 : f32 to vector<1x256xf32>
    %310 = arith.maximumf %308, %309 : vector<1x256xf32>
    %c0_148 = arith.constant 0 : index
    %c12_149 = arith.constant 12 : index
    %311 = memref.load %arg3[%c0_148, %c12_149] : memref<1x20xf32, #tpu.memory_space<smem>>
    %312 = vector.broadcast %311 : f32 to vector<1x256xf32>
    %313 = arith.mulf %310, %312 : vector<1x256xf32>
    %314 = arith.addf %290, %313 : vector<1x256xf32>
    %c13 = arith.constant 13 : index
    %c0_150 = arith.constant 0 : index
    %315 = memref.load %arg1[%c13, %c0_150] : memref<20x4xf32, #tpu.memory_space<smem>>
    %316 = vector.broadcast %315 : f32 to vector<1x256xf32>
    %317 = arith.mulf %0, %316 : vector<1x256xf32>
    %c13_151 = arith.constant 13 : index
    %c1_152 = arith.constant 1 : index
    %318 = memref.load %arg1[%c13_151, %c1_152] : memref<20x4xf32, #tpu.memory_space<smem>>
    %319 = vector.broadcast %318 : f32 to vector<1x256xf32>
    %320 = arith.mulf %1, %319 : vector<1x256xf32>
    %321 = arith.addf %317, %320 : vector<1x256xf32>
    %c13_153 = arith.constant 13 : index
    %c2_154 = arith.constant 2 : index
    %322 = memref.load %arg1[%c13_153, %c2_154] : memref<20x4xf32, #tpu.memory_space<smem>>
    %323 = vector.broadcast %322 : f32 to vector<1x256xf32>
    %324 = arith.mulf %2, %323 : vector<1x256xf32>
    %325 = arith.addf %321, %324 : vector<1x256xf32>
    %c13_155 = arith.constant 13 : index
    %c3_156 = arith.constant 3 : index
    %326 = memref.load %arg1[%c13_155, %c3_156] : memref<20x4xf32, #tpu.memory_space<smem>>
    %327 = vector.broadcast %326 : f32 to vector<1x256xf32>
    %328 = arith.mulf %3, %327 : vector<1x256xf32>
    %329 = arith.addf %325, %328 : vector<1x256xf32>
    %c13_157 = arith.constant 13 : index
    %330 = memref.load %arg2[%c13_157] : memref<20xf32, #tpu.memory_space<smem>>
    %331 = vector.broadcast %330 : f32 to vector<1x256xf32>
    %332 = arith.addf %329, %331 : vector<1x256xf32>
    %cst_158 = arith.constant 0.000000e+00 : f32
    %333 = vector.broadcast %cst_158 : f32 to vector<1x256xf32>
    %334 = arith.maximumf %332, %333 : vector<1x256xf32>
    %c0_159 = arith.constant 0 : index
    %c13_160 = arith.constant 13 : index
    %335 = memref.load %arg3[%c0_159, %c13_160] : memref<1x20xf32, #tpu.memory_space<smem>>
    %336 = vector.broadcast %335 : f32 to vector<1x256xf32>
    %337 = arith.mulf %334, %336 : vector<1x256xf32>
    %338 = arith.addf %314, %337 : vector<1x256xf32>
    %c14 = arith.constant 14 : index
    %c0_161 = arith.constant 0 : index
    %339 = memref.load %arg1[%c14, %c0_161] : memref<20x4xf32, #tpu.memory_space<smem>>
    %340 = vector.broadcast %339 : f32 to vector<1x256xf32>
    %341 = arith.mulf %0, %340 : vector<1x256xf32>
    %c14_162 = arith.constant 14 : index
    %c1_163 = arith.constant 1 : index
    %342 = memref.load %arg1[%c14_162, %c1_163] : memref<20x4xf32, #tpu.memory_space<smem>>
    %343 = vector.broadcast %342 : f32 to vector<1x256xf32>
    %344 = arith.mulf %1, %343 : vector<1x256xf32>
    %345 = arith.addf %341, %344 : vector<1x256xf32>
    %c14_164 = arith.constant 14 : index
    %c2_165 = arith.constant 2 : index
    %346 = memref.load %arg1[%c14_164, %c2_165] : memref<20x4xf32, #tpu.memory_space<smem>>
    %347 = vector.broadcast %346 : f32 to vector<1x256xf32>
    %348 = arith.mulf %2, %347 : vector<1x256xf32>
    %349 = arith.addf %345, %348 : vector<1x256xf32>
    %c14_166 = arith.constant 14 : index
    %c3_167 = arith.constant 3 : index
    %350 = memref.load %arg1[%c14_166, %c3_167] : memref<20x4xf32, #tpu.memory_space<smem>>
    %351 = vector.broadcast %350 : f32 to vector<1x256xf32>
    %352 = arith.mulf %3, %351 : vector<1x256xf32>
    %353 = arith.addf %349, %352 : vector<1x256xf32>
    %c14_168 = arith.constant 14 : index
    %354 = memref.load %arg2[%c14_168] : memref<20xf32, #tpu.memory_space<smem>>
    %355 = vector.broadcast %354 : f32 to vector<1x256xf32>
    %356 = arith.addf %353, %355 : vector<1x256xf32>
    %cst_169 = arith.constant 0.000000e+00 : f32
    %357 = vector.broadcast %cst_169 : f32 to vector<1x256xf32>
    %358 = arith.maximumf %356, %357 : vector<1x256xf32>
    %c0_170 = arith.constant 0 : index
    %c14_171 = arith.constant 14 : index
    %359 = memref.load %arg3[%c0_170, %c14_171] : memref<1x20xf32, #tpu.memory_space<smem>>
    %360 = vector.broadcast %359 : f32 to vector<1x256xf32>
    %361 = arith.mulf %358, %360 : vector<1x256xf32>
    %362 = arith.addf %338, %361 : vector<1x256xf32>
    %c15 = arith.constant 15 : index
    %c0_172 = arith.constant 0 : index
    %363 = memref.load %arg1[%c15, %c0_172] : memref<20x4xf32, #tpu.memory_space<smem>>
    %364 = vector.broadcast %363 : f32 to vector<1x256xf32>
    %365 = arith.mulf %0, %364 : vector<1x256xf32>
    %c15_173 = arith.constant 15 : index
    %c1_174 = arith.constant 1 : index
    %366 = memref.load %arg1[%c15_173, %c1_174] : memref<20x4xf32, #tpu.memory_space<smem>>
    %367 = vector.broadcast %366 : f32 to vector<1x256xf32>
    %368 = arith.mulf %1, %367 : vector<1x256xf32>
    %369 = arith.addf %365, %368 : vector<1x256xf32>
    %c15_175 = arith.constant 15 : index
    %c2_176 = arith.constant 2 : index
    %370 = memref.load %arg1[%c15_175, %c2_176] : memref<20x4xf32, #tpu.memory_space<smem>>
    %371 = vector.broadcast %370 : f32 to vector<1x256xf32>
    %372 = arith.mulf %2, %371 : vector<1x256xf32>
    %373 = arith.addf %369, %372 : vector<1x256xf32>
    %c15_177 = arith.constant 15 : index
    %c3_178 = arith.constant 3 : index
    %374 = memref.load %arg1[%c15_177, %c3_178] : memref<20x4xf32, #tpu.memory_space<smem>>
    %375 = vector.broadcast %374 : f32 to vector<1x256xf32>
    %376 = arith.mulf %3, %375 : vector<1x256xf32>
    %377 = arith.addf %373, %376 : vector<1x256xf32>
    %c15_179 = arith.constant 15 : index
    %378 = memref.load %arg2[%c15_179] : memref<20xf32, #tpu.memory_space<smem>>
    %379 = vector.broadcast %378 : f32 to vector<1x256xf32>
    %380 = arith.addf %377, %379 : vector<1x256xf32>
    %cst_180 = arith.constant 0.000000e+00 : f32
    %381 = vector.broadcast %cst_180 : f32 to vector<1x256xf32>
    %382 = arith.maximumf %380, %381 : vector<1x256xf32>
    %c0_181 = arith.constant 0 : index
    %c15_182 = arith.constant 15 : index
    %383 = memref.load %arg3[%c0_181, %c15_182] : memref<1x20xf32, #tpu.memory_space<smem>>
    %384 = vector.broadcast %383 : f32 to vector<1x256xf32>
    %385 = arith.mulf %382, %384 : vector<1x256xf32>
    %386 = arith.addf %362, %385 : vector<1x256xf32>
    %c16 = arith.constant 16 : index
    %c0_183 = arith.constant 0 : index
    %387 = memref.load %arg1[%c16, %c0_183] : memref<20x4xf32, #tpu.memory_space<smem>>
    %388 = vector.broadcast %387 : f32 to vector<1x256xf32>
    %389 = arith.mulf %0, %388 : vector<1x256xf32>
    %c16_184 = arith.constant 16 : index
    %c1_185 = arith.constant 1 : index
    %390 = memref.load %arg1[%c16_184, %c1_185] : memref<20x4xf32, #tpu.memory_space<smem>>
    %391 = vector.broadcast %390 : f32 to vector<1x256xf32>
    %392 = arith.mulf %1, %391 : vector<1x256xf32>
    %393 = arith.addf %389, %392 : vector<1x256xf32>
    %c16_186 = arith.constant 16 : index
    %c2_187 = arith.constant 2 : index
    %394 = memref.load %arg1[%c16_186, %c2_187] : memref<20x4xf32, #tpu.memory_space<smem>>
    %395 = vector.broadcast %394 : f32 to vector<1x256xf32>
    %396 = arith.mulf %2, %395 : vector<1x256xf32>
    %397 = arith.addf %393, %396 : vector<1x256xf32>
    %c16_188 = arith.constant 16 : index
    %c3_189 = arith.constant 3 : index
    %398 = memref.load %arg1[%c16_188, %c3_189] : memref<20x4xf32, #tpu.memory_space<smem>>
    %399 = vector.broadcast %398 : f32 to vector<1x256xf32>
    %400 = arith.mulf %3, %399 : vector<1x256xf32>
    %401 = arith.addf %397, %400 : vector<1x256xf32>
    %c16_190 = arith.constant 16 : index
    %402 = memref.load %arg2[%c16_190] : memref<20xf32, #tpu.memory_space<smem>>
    %403 = vector.broadcast %402 : f32 to vector<1x256xf32>
    %404 = arith.addf %401, %403 : vector<1x256xf32>
    %cst_191 = arith.constant 0.000000e+00 : f32
    %405 = vector.broadcast %cst_191 : f32 to vector<1x256xf32>
    %406 = arith.maximumf %404, %405 : vector<1x256xf32>
    %c0_192 = arith.constant 0 : index
    %c16_193 = arith.constant 16 : index
    %407 = memref.load %arg3[%c0_192, %c16_193] : memref<1x20xf32, #tpu.memory_space<smem>>
    %408 = vector.broadcast %407 : f32 to vector<1x256xf32>
    %409 = arith.mulf %406, %408 : vector<1x256xf32>
    %410 = arith.addf %386, %409 : vector<1x256xf32>
    %c17 = arith.constant 17 : index
    %c0_194 = arith.constant 0 : index
    %411 = memref.load %arg1[%c17, %c0_194] : memref<20x4xf32, #tpu.memory_space<smem>>
    %412 = vector.broadcast %411 : f32 to vector<1x256xf32>
    %413 = arith.mulf %0, %412 : vector<1x256xf32>
    %c17_195 = arith.constant 17 : index
    %c1_196 = arith.constant 1 : index
    %414 = memref.load %arg1[%c17_195, %c1_196] : memref<20x4xf32, #tpu.memory_space<smem>>
    %415 = vector.broadcast %414 : f32 to vector<1x256xf32>
    %416 = arith.mulf %1, %415 : vector<1x256xf32>
    %417 = arith.addf %413, %416 : vector<1x256xf32>
    %c17_197 = arith.constant 17 : index
    %c2_198 = arith.constant 2 : index
    %418 = memref.load %arg1[%c17_197, %c2_198] : memref<20x4xf32, #tpu.memory_space<smem>>
    %419 = vector.broadcast %418 : f32 to vector<1x256xf32>
    %420 = arith.mulf %2, %419 : vector<1x256xf32>
    %421 = arith.addf %417, %420 : vector<1x256xf32>
    %c17_199 = arith.constant 17 : index
    %c3_200 = arith.constant 3 : index
    %422 = memref.load %arg1[%c17_199, %c3_200] : memref<20x4xf32, #tpu.memory_space<smem>>
    %423 = vector.broadcast %422 : f32 to vector<1x256xf32>
    %424 = arith.mulf %3, %423 : vector<1x256xf32>
    %425 = arith.addf %421, %424 : vector<1x256xf32>
    %c17_201 = arith.constant 17 : index
    %426 = memref.load %arg2[%c17_201] : memref<20xf32, #tpu.memory_space<smem>>
    %427 = vector.broadcast %426 : f32 to vector<1x256xf32>
    %428 = arith.addf %425, %427 : vector<1x256xf32>
    %cst_202 = arith.constant 0.000000e+00 : f32
    %429 = vector.broadcast %cst_202 : f32 to vector<1x256xf32>
    %430 = arith.maximumf %428, %429 : vector<1x256xf32>
    %c0_203 = arith.constant 0 : index
    %c17_204 = arith.constant 17 : index
    %431 = memref.load %arg3[%c0_203, %c17_204] : memref<1x20xf32, #tpu.memory_space<smem>>
    %432 = vector.broadcast %431 : f32 to vector<1x256xf32>
    %433 = arith.mulf %430, %432 : vector<1x256xf32>
    %434 = arith.addf %410, %433 : vector<1x256xf32>
    %c18 = arith.constant 18 : index
    %c0_205 = arith.constant 0 : index
    %435 = memref.load %arg1[%c18, %c0_205] : memref<20x4xf32, #tpu.memory_space<smem>>
    %436 = vector.broadcast %435 : f32 to vector<1x256xf32>
    %437 = arith.mulf %0, %436 : vector<1x256xf32>
    %c18_206 = arith.constant 18 : index
    %c1_207 = arith.constant 1 : index
    %438 = memref.load %arg1[%c18_206, %c1_207] : memref<20x4xf32, #tpu.memory_space<smem>>
    %439 = vector.broadcast %438 : f32 to vector<1x256xf32>
    %440 = arith.mulf %1, %439 : vector<1x256xf32>
    %441 = arith.addf %437, %440 : vector<1x256xf32>
    %c18_208 = arith.constant 18 : index
    %c2_209 = arith.constant 2 : index
    %442 = memref.load %arg1[%c18_208, %c2_209] : memref<20x4xf32, #tpu.memory_space<smem>>
    %443 = vector.broadcast %442 : f32 to vector<1x256xf32>
    %444 = arith.mulf %2, %443 : vector<1x256xf32>
    %445 = arith.addf %441, %444 : vector<1x256xf32>
    %c18_210 = arith.constant 18 : index
    %c3_211 = arith.constant 3 : index
    %446 = memref.load %arg1[%c18_210, %c3_211] : memref<20x4xf32, #tpu.memory_space<smem>>
    %447 = vector.broadcast %446 : f32 to vector<1x256xf32>
    %448 = arith.mulf %3, %447 : vector<1x256xf32>
    %449 = arith.addf %445, %448 : vector<1x256xf32>
    %c18_212 = arith.constant 18 : index
    %450 = memref.load %arg2[%c18_212] : memref<20xf32, #tpu.memory_space<smem>>
    %451 = vector.broadcast %450 : f32 to vector<1x256xf32>
    %452 = arith.addf %449, %451 : vector<1x256xf32>
    %cst_213 = arith.constant 0.000000e+00 : f32
    %453 = vector.broadcast %cst_213 : f32 to vector<1x256xf32>
    %454 = arith.maximumf %452, %453 : vector<1x256xf32>
    %c0_214 = arith.constant 0 : index
    %c18_215 = arith.constant 18 : index
    %455 = memref.load %arg3[%c0_214, %c18_215] : memref<1x20xf32, #tpu.memory_space<smem>>
    %456 = vector.broadcast %455 : f32 to vector<1x256xf32>
    %457 = arith.mulf %454, %456 : vector<1x256xf32>
    %458 = arith.addf %434, %457 : vector<1x256xf32>
    %c19 = arith.constant 19 : index
    %c0_216 = arith.constant 0 : index
    %459 = memref.load %arg1[%c19, %c0_216] : memref<20x4xf32, #tpu.memory_space<smem>>
    %460 = vector.broadcast %459 : f32 to vector<1x256xf32>
    %461 = arith.mulf %0, %460 : vector<1x256xf32>
    %c19_217 = arith.constant 19 : index
    %c1_218 = arith.constant 1 : index
    %462 = memref.load %arg1[%c19_217, %c1_218] : memref<20x4xf32, #tpu.memory_space<smem>>
    %463 = vector.broadcast %462 : f32 to vector<1x256xf32>
    %464 = arith.mulf %1, %463 : vector<1x256xf32>
    %465 = arith.addf %461, %464 : vector<1x256xf32>
    %c19_219 = arith.constant 19 : index
    %c2_220 = arith.constant 2 : index
    %466 = memref.load %arg1[%c19_219, %c2_220] : memref<20x4xf32, #tpu.memory_space<smem>>
    %467 = vector.broadcast %466 : f32 to vector<1x256xf32>
    %468 = arith.mulf %2, %467 : vector<1x256xf32>
    %469 = arith.addf %465, %468 : vector<1x256xf32>
    %c19_221 = arith.constant 19 : index
    %c3_222 = arith.constant 3 : index
    %470 = memref.load %arg1[%c19_221, %c3_222] : memref<20x4xf32, #tpu.memory_space<smem>>
    %471 = vector.broadcast %470 : f32 to vector<1x256xf32>
    %472 = arith.mulf %3, %471 : vector<1x256xf32>
    %473 = arith.addf %469, %472 : vector<1x256xf32>
    %c19_223 = arith.constant 19 : index
    %474 = memref.load %arg2[%c19_223] : memref<20xf32, #tpu.memory_space<smem>>
    %475 = vector.broadcast %474 : f32 to vector<1x256xf32>
    %476 = arith.addf %473, %475 : vector<1x256xf32>
    %cst_224 = arith.constant 0.000000e+00 : f32
    %477 = vector.broadcast %cst_224 : f32 to vector<1x256xf32>
    %478 = arith.maximumf %476, %477 : vector<1x256xf32>
    %c0_225 = arith.constant 0 : index
    %c19_226 = arith.constant 19 : index
    %479 = memref.load %arg3[%c0_225, %c19_226] : memref<1x20xf32, #tpu.memory_space<smem>>
    %480 = vector.broadcast %479 : f32 to vector<1x256xf32>
    %481 = arith.mulf %478, %480 : vector<1x256xf32>
    %482 = arith.addf %458, %481 : vector<1x256xf32>
    %c0_227 = arith.constant 0 : index
    %483 = memref.load %arg4[%c0_227] : memref<1xf32, #tpu.memory_space<smem>>
    %484 = vector.broadcast %483 : f32 to vector<1x256xf32>
    %485 = arith.addf %482, %484 : vector<1x256xf32>
    %c0_228 = arith.constant 0 : index
    %c0_229 = arith.constant 0 : index
    %486 = vector.load %arg6[%c0_228, %c0_229] : memref<1x256xf32, #tpu.memory_space<vmem>>, vector<1x256xf32>
    tpu.vector_store %arg6[%c0_228, %c0_229], %485 {strides = array<i32>} : memref<1x256xf32, #tpu.memory_space<vmem>>, vector<1x256xf32>,
    return
  }
  func.func @transform_0(%arg0: i32) -> (i32, i32) {
    %c0_i32 = arith.constant 0 : i32
    %c0_i32_0 = arith.constant 0 : i32
    %c0_i32_1 = arith.constant 0 : i32
    return %c0_i32, %c0_i32_0 : i32, i32
  }
  func.func @transform_1(%arg0: i32) -> i32 {
    %c0_i32 = arith.constant 0 : i32
    %c0_i32_0 = arith.constant 0 : i32
    return %c0_i32 : i32
  }
  func.func @transform_2(%arg0: i32) -> (i32, i32) {
    %c0_i32 = arith.constant 0 : i32
    %c0_i32_0 = arith.constant 0 : i32
    %c0_i32_1 = arith.constant 0 : i32
    return %c0_i32, %c0_i32_0 : i32, i32
  }
  func.func @transform_3(%arg0: i32) -> i32 {
    %c0_i32 = arith.constant 0 : i32
    %c0_i32_0 = arith.constant 0 : i32
    return %c0_i32 : i32
  }
  func.func @transform_4(%arg0: i32) -> (i32, i32) {
    %c0_i32 = arith.constant 0 : i32
    %c0_i32_0 = arith.constant 0 : i32
    return %c0_i32, %arg0 : i32, i32
  }
  func.func @transform_5(%arg0: i32) -> (i32, i32) {
    %c0_i32 = arith.constant 0 : i32
    %c0_i32_0 = arith.constant 0 : i32
    return %c0_i32, %arg0 : i32, i32
  }
}

</mosaic_0001>

<llo_original>
// kernel: tpu_custom_call.1
$region0: #{tpu_custom_call.1}
  #allocation0 [shape = 'u32[]', space=smem, size = 0x4, offset = 0x4, fixed_abs, tag = 'smem constant byte address 0x4 - core index']
  #allocation1 [shape = 'u32[144,128]{1,0:T(1,128)}', space=vmem, size = 0x12000, scoped, tag = 'internal scratch']
  #allocation2 [shape = 'f32[1]{0:T(128)S(6)}', space=smem, size = 0x200, scoped, tag = 'scoped memory for tpu_custom_call.1']
  %s0 = inlined_call_operand.vmem [shape: f32[20,4], index: 0, kind: input, shape index: {}]
  %s1 = inlined_call_operand.vmem [shape: f32[20], index: 1, kind: input, shape index: {}]
  %s2 = inlined_call_operand.vmem [shape: f32[1,20], index: 2, kind: input, shape index: {}]
  %s3 = inlined_call_operand.<no memory space> [shape: f32[1], index: 3, kind: input, shape index: {}]
  %s4 = inlined_call_operand.vmem [shape: f32[4,512], index: 4, kind: input, shape index: {}]
  %s5 = inlined_call_operand.hbm [shape: f32[1,512], index: 5, kind: output, shape index: {}]
  %s6 = sld [smem:[#allocation0]]
  $region65: #{tpu_custom_call.1} parent=0
    _
  %s8 = ssub.s32 1, %s6
  %s9 = scalar_select 0, %s8, %s6
  %10 = sst [smem:[#allocation2]] %s3
  $region1: #{tpu_custom_call.1} parent=0
    #allocation3 [shape = 'u8[12288]{0}', space=smem, size = 0x3000, scoped, tag = 'input window, operand 0, single buffered']
    #allocation4 [shape = 's32[2]{0}', space=sflag, size = 0x8, scoped, tag = 'scoped memory for tpu_custom_call.1']
    #allocation5 [shape = 's32[2]{0}', space=sflag, size = 0x8, scoped, tag = 'scoped memory for tpu_custom_call.1']
    #allocation6 [shape = 'u8[512]{0}', space=smem, size = 0x200, scoped, tag = 'input window, operand 1, single buffered']
    #allocation7 [shape = 's32[1]{0}', space=sflag, size = 0x4, scoped, tag = 'scoped memory for tpu_custom_call.1']
    #allocation8 [shape = 'u8[512]{0}', space=smem, size = 0x200, scoped, tag = 'input window, operand 2, single buffered']
    #allocation9 [shape = 'u8[2048]{0}', space=vmem, size = 0x800, scoped, tag = 'output window, operand 0']
    %11 = vsyncpa [#allocation5], 0
    %12 = vsyncpa [#allocation7], 0
    %13 = vsyncpa [#allocation4], 0
    %s14 = scalar_lea.sflag [#allocation4], 1
    %15 = vsyncpa %s14, 0
    loop: start=0, step=1, limit=4
    $region2: #{tpu_custom_call.1} parent=1 // loop_pre_header
      _
    $region3: #{tpu_custom_call.1} parent=1 // loop_header
      %s17 = sphi 0, %s21
      %p18 = scmp.ge.s32.totalorder %s17, 4
      %s25 = sphi 0, %s25
      %s27 = sphi 0, %s25
      %s28 = sphi 0, %s27
      %s42 = sphi 0, %s28
      %s46 = sphi 0, %s46
      %s48 = sphi 0, %s46
      %s49 = sphi 0, %s48
      %s63 = sphi 0, %s49
      %s67 = sphi 0, %s67
      %s69 = sphi 0, %s67
      %s70 = sphi 0, %s69
      %s84 = sphi 0, %s70
      %s88 = sphi 0, %s88
      %s90 = sphi 0, %s88
      %s91 = sphi 0, %s90
      %s105 = sphi 0, %s91
      %s111 = sphi 0, %s113
      %s114 = sphi 0, %s111
      %s115 = sphi 0, %s114
      %s131 = sphi 0, %s115
      %s137 = sphi 0, %s139
      %s140 = sphi 0, %s137
      %s141 = sphi 0, %s140
      %s157 = sphi 0, %s141
    $region4: #{tpu_custom_call.1} parent=1 // loop_header_branch
      %20 = sbr.rel (%p18) target = $region8
    $region5: #{tpu_custom_call.1} parent=1 // loop_body
      %s22 = ssub.s32 %s17, 1
      %s23 = ssub.s32 %s17, 2
      %s24 = sadd.s32 %s17, 1
      %s26 = sadd.s32 %s25, 1
      %p29 = scmp.eq.s32.totalorder %s17, 1
      %p30 = scmp.ne.s32.totalorder %s25, %s27
      %p31 = scmp.eq.s32.totalorder %s17, 0
      %p32 = por %p30, %p31
      %p33 = scmp.ne.s32.totalorder %s25, %s27
      %p34 = scmp.eq.s32.totalorder %s22, 1
      %p35 = por %p33, %p34
      %p36 = scmp.ne.s32.totalorder %s27, %s28
      %p37 = scmp.eq.s32.totalorder %s22, 0
      %p38 = por %p36, %p37
      %p39 = scmp.ne.s32.totalorder %s27, %s28
      %p40 = scmp.eq.s32.totalorder %s23, 1
      %p41 = por %p39, %p40
      %p43 = scmp.ne.s32.totalorder %s28, %s42
      %p44 = scmp.eq.s32.totalorder %s23, 0
      %p45 = por %p43, %p44
      %s47 = sadd.s32 %s46, 1
      %p50 = scmp.eq.s32.totalorder %s17, 1
      %p51 = scmp.ne.s32.totalorder %s46, %s48
      %p52 = scmp.eq.s32.totalorder %s17, 0
      %p53 = por %p51, %p52
      %p54 = scmp.ne.s32.totalorder %s46, %s48
      %p55 = scmp.eq.s32.totalorder %s22, 1
      %p56 = por %p54, %p55
      %p57 = scmp.ne.s32.totalorder %s48, %s49
      %p58 = scmp.eq.s32.totalorder %s22, 0
      %p59 = por %p57, %p58
      %p60 = scmp.ne.s32.totalorder %s48, %s49
      %p61 = scmp.eq.s32.totalorder %s23, 1
      %p62 = por %p60, %p61
      %p64 = scmp.ne.s32.totalorder %s49, %s63
      %p65 = scmp.eq.s32.totalorder %s23, 0
      %p66 = por %p64, %p65
      %s68 = sadd.s32 %s67, 1
      %p71 = scmp.eq.s32.totalorder %s17, 1
      %p72 = scmp.ne.s32.totalorder %s67, %s69
      %p73 = scmp.eq.s32.totalorder %s17, 0
      %p74 = por %p72, %p73
      %p75 = scmp.ne.s32.totalorder %s67, %s69
      %p76 = scmp.eq.s32.totalorder %s22, 1
      %p77 = por %p75, %p76
      %p78 = scmp.ne.s32.totalorder %s69, %s70
      %p79 = scmp.eq.s32.totalorder %s22, 0
      %p80 = por %p78, %p79
      %p81 = scmp.ne.s32.totalorder %s69, %s70
      %p82 = scmp.eq.s32.totalorder %s23, 1
      %p83 = por %p81, %p82
      %p85 = scmp.ne.s32.totalorder %s70, %s84
      %p86 = scmp.eq.s32.totalorder %s23, 0
      %p87 = por %p85, %p86
      %s89 = sadd.s32 %s88, 1
      %p92 = scmp.eq.s32.totalorder %s17, 1
      %p93 = scmp.ne.s32.totalorder %s88, %s90
      %p94 = scmp.eq.s32.totalorder %s17, 0
      %p95 = por %p93, %p94
      %p96 = scmp.ne.s32.totalorder %s88, %s90
      %p97 = scmp.eq.s32.totalorder %s22, 1
      %p98 = por %p96, %p97
      %p99 = scmp.ne.s32.totalorder %s90, %s91
      %p100 = scmp.eq.s32.totalorder %s22, 0
      %p101 = por %p99, %p100
      %p102 = scmp.ne.s32.totalorder %s90, %s91
      %p103 = scmp.eq.s32.totalorder %s23, 1
      %p104 = por %p102, %p103
      %p106 = scmp.ne.s32.totalorder %s91, %s105
      %p107 = scmp.eq.s32.totalorder %s23, 0
      %p108 = por %p106, %p107
      %s109 = ssub.s32 %s17, %s24
      %p110 = scmp.eq.s32.totalorder %s109, 0
      %s112 = sadd.s32 %s111, 1
      %s113 = scalar_select %p110, %s111, %s112
      %p116 = pneg %p110
      %p117 = scmp.eq.s32.totalorder %s17, 1
      %p118 = por %p116, %p117
      %p119 = scmp.ne.s32.totalorder %s111, %s114
      %p120 = scmp.eq.s32.totalorder %s17, 0
      %p121 = por %p119, %p120
      %p122 = scmp.ne.s32.totalorder %s111, %s114
      %p123 = scmp.eq.s32.totalorder %s22, 1
      %p124 = por %p122, %p123
      %p125 = scmp.ne.s32.totalorder %s114, %s115
      %p126 = scmp.eq.s32.totalorder %s22, 0
      %p127 = por %p125, %p126
      %p128 = scmp.ne.s32.totalorder %s114, %s115
      %p129 = scmp.eq.s32.totalorder %s23, 1
      %p130 = por %p128, %p129
      %p132 = scmp.ne.s32.totalorder %s115, %s131
      %p133 = scmp.eq.s32.totalorder %s23, 0
      %p134 = por %p132, %p133
      %s135 = ssub.s32 %s17, %s24
      %p136 = scmp.eq.s32.totalorder %s135, 0
      %s138 = sadd.s32 %s137, 1
      %s139 = scalar_select %p136, %s137, %s138
      %p142 = pneg %p136
      %p143 = scmp.eq.s32.totalorder %s17, 1
      %p144 = por %p142, %p143
      %p145 = scmp.ne.s32.totalorder %s137, %s140
      %p146 = scmp.eq.s32.totalorder %s17, 0
      %p147 = por %p145, %p146
      %p148 = scmp.ne.s32.totalorder %s137, %s140
      %p149 = scmp.eq.s32.totalorder %s22, 1
      %p150 = por %p148, %p149
      %p151 = scmp.ne.s32.totalorder %s140, %s141
      %p152 = scmp.eq.s32.totalorder %s22, 0
      %p153 = por %p151, %p152
      %p154 = scmp.ne.s32.totalorder %s140, %s141
      %p155 = scmp.eq.s32.totalorder %s23, 1
      %p156 = por %p154, %p155
      %p158 = scmp.ne.s32.totalorder %s141, %s157
      %p159 = scmp.eq.s32.totalorder %s23, 0
      %p160 = por %p158, %p159
      %p161 = scmp.le.s32.totalorder 1, %s17
      %p162 = scmp.lt.s32.totalorder %s17, 3
      %p163 = pnand %p161, %p162
      %p164 = pneg %p163
      // Predicated region
      $region9: #{tpu_custom_call.1} parent=5 // pred_check
        _
      $region10: #{tpu_custom_call.1} parent=5 // pred_check_branch
        %166 = sbr.rel (%p163) target = $region12
      $region11: #{tpu_custom_call.1} parent=5 // pred_region
        %s167 = ssub.s32 %s17, 1
        // Predicated region
        $region13: #{tpu_custom_call.1} parent=11 // pred_check
          %p168 = pneg %p38
        $region14: #{tpu_custom_call.1} parent=11 // pred_check_branch
          %170 = sbr.rel (%p168) target = $region16
        $region15: #{tpu_custom_call.1} parent=11 // pred_region
          %s172 = ssub.s32 384, 384
          %173 = vsyncadd [#allocation5], %s172
          %s174 = sshll.u32 %s0, 4
          %s175 = int_to_ptr.vmem [resolvable:$true] %s174
          %180 = dma.vmem_to_smem %s175, 384, [#allocation3], [#allocation5], 128, 128, 8
        $region16: #{tpu_custom_call.1} parent=11 // pred_fallthru
          _
        // Predicated region
        $region17: #{tpu_custom_call.1} parent=11 // pred_check
          %p181 = pneg %p59
        $region18: #{tpu_custom_call.1} parent=11 // pred_check_branch
          %183 = sbr.rel (%p181) target = $region20
        $region19: #{tpu_custom_call.1} parent=11 // pred_region
          %s185 = ssub.s32 16, 16
          %186 = vsyncadd [#allocation7], %s185
          %s188 = sshll.u32 %s1, 4
          %s189 = int_to_ptr.vmem [resolvable:$true] %s188
          %191 = dma.vmem_to_smem %s189, 16, [#allocation6], [#allocation7]
        $region20: #{tpu_custom_call.1} parent=11 // pred_fallthru
          _
        // Predicated region
        $region21: #{tpu_custom_call.1} parent=11 // pred_check
          %p192 = pneg %p80
        $region22: #{tpu_custom_call.1} parent=11 // pred_check_branch
          %194 = sbr.rel (%p192) target = $region24
        $region23: #{tpu_custom_call.1} parent=11 // pred_region
          %s196 = ssub.s32 16, 16
          %197 = vsyncadd [#allocation7], %s196
          %s199 = sshll.u32 %s2, 4
          %s200 = int_to_ptr.vmem [resolvable:$true] %s199
          %202 = dma.vmem_to_smem %s200, 16, [#allocation8], [#allocation7]
        $region24: #{tpu_custom_call.1} parent=11 // pred_fallthru
          _
        // Predicated region
        $region25: #{tpu_custom_call.1} parent=11 // pred_check
          %p203 = pneg %p101
        $region26: #{tpu_custom_call.1} parent=11 // pred_check_branch
          %205 = sbr.rel (%p203) target = $region28
        $region27: #{tpu_custom_call.1} parent=11 // pred_region
          _
        $region28: #{tpu_custom_call.1} parent=11 // pred_fallthru
          _
      $region12: #{tpu_custom_call.1} parent=5 // pred_fallthru
        _
      %p206 = scmp.lt.s32.totalorder %s17, 2
      // Predicated region
      $region29: #{tpu_custom_call.1} parent=5 // pred_check
        %p207 = pneg %p206
      $region30: #{tpu_custom_call.1} parent=5 // pred_check_branch
        %209 = sbr.rel (%p207) target = $region32
      $region31: #{tpu_custom_call.1} parent=5 // pred_region
        // Predicated region
        $region33: #{tpu_custom_call.1} parent=31 // pred_check
          %p210 = pneg %p121
        $region34: #{tpu_custom_call.1} parent=31 // pred_check_branch
          %212 = sbr.rel (%p210) target = $region36
        $region35: #{tpu_custom_call.1} parent=31 // pred_region
          %s213 = smul.u32 2, %s17
          %p214 = scmp.lt.s32.totalorder %s213, 3
          %s215 = scalar_select %p214, %s213, 3
          %s216 = smul.addr %s215, 4
          %s217 = scalar_lea.vmem %s4, %s216
          %s218 = smul.u32 2, %s17
        $region36: #{tpu_custom_call.1} parent=31 // pred_fallthru
          _
      $region32: #{tpu_custom_call.1} parent=5 // pred_fallthru
        _
      %p219 = scmp.le.s32.totalorder 1, %s17
      %p220 = scmp.lt.s32.totalorder %s17, 3
      %p221 = pnand %p219, %p220
      %p222 = pneg %p221
      // Predicated region
      $region37: #{tpu_custom_call.1} parent=5 // pred_check
        _
      $region38: #{tpu_custom_call.1} parent=5 // pred_check_branch
        %224 = sbr.rel (%p221) target = $region40
      $region39: #{tpu_custom_call.1} parent=5 // pred_region
        %s225 = ssub.s32 %s17, 1
        // Predicated region
        $region41: #{tpu_custom_call.1} parent=39 // pred_check
          %p226 = pneg %p38
        $region42: #{tpu_custom_call.1} parent=39 // pred_check_branch
          %228 = sbr.rel (%p226) target = $region44
        $region43: #{tpu_custom_call.1} parent=39 // pred_region
          %229 = dma.done [#allocation5], 384
        $region44: #{tpu_custom_call.1} parent=39 // pred_fallthru
          _
        // Predicated region
        $region45: #{tpu_custom_call.1} parent=39 // pred_check
          %p230 = pneg %p59
        $region46: #{tpu_custom_call.1} parent=39 // pred_check_branch
          %232 = sbr.rel (%p230) target = $region48
        $region47: #{tpu_custom_call.1} parent=39 // pred_region
          %233 = dma.done [#allocation7], 16
        $region48: #{tpu_custom_call.1} parent=39 // pred_fallthru
          _
        // Predicated region
        $region49: #{tpu_custom_call.1} parent=39 // pred_check
          %p234 = pneg %p80
        $region50: #{tpu_custom_call.1} parent=39 // pred_check_branch
          %236 = sbr.rel (%p234) target = $region52
        $region51: #{tpu_custom_call.1} parent=39 // pred_region
          %237 = dma.done [#allocation7], 16
        $region52: #{tpu_custom_call.1} parent=39 // pred_fallthru
          _
        %238 = sfence
        %p239 = pneg %p38
        %p240 = pneg %p35
        %p241 = pneg %p59
        %p242 = pneg %p56
        %p243 = pneg %p80
        %p244 = pneg %p77
        %p245 = pneg %p101
        %p246 = pneg %p98
        %s247 = smul.u32 2, %s22
        %p248 = scmp.lt.s32.totalorder %s247, 3
        %s249 = scalar_select %p248, %s247, 3
        %s250 = smul.addr %s249, 4
        %s251 = scalar_lea.vmem %s4, %s250
        %p252 = pneg %p127
        %p253 = pneg %p124
        %p254 = pneg %p153
        %p255 = pneg %p150
        %s256 = sand.u32 %s140, 1
        %s257 = scalar_lea.sflag [#allocation4], %s256
        %s258 = sand.u32 %s140, 1
        %s259 = smul.addr %s258, 2
        %s260 = scalar_lea.vmem [#allocation9], %s259
        %s261 = smul.u32 2, %s22
        %p262 = scmp.lt.s32.totalorder %s261, 3
        %s263 = scalar_select %p262, %s261, 3
        %s264 = smul.addr %s263, 4
        %s265 = scalar_lea.vmem %s4, %s264
        %s266 = smul.u32 2, %s22
        %s267 = smul.u32 2, %s22
        %v268 = vld [vmem:[%s265] ss:$4 sm:$0x3]
        %s269 = scalar_lea.vmem %s265, 1
        %v270 = vld [vmem:[%s269] ss:$4 sm:$0x3]
        %s271 = scalar_lea.vmem %s265, 2
        %v272 = vld [vmem:[%s271] ss:$4 sm:$0x3]
        %s273 = scalar_lea.vmem %s265, 3
        %v274 = vld [vmem:[%s273] ss:$4 sm:$0x3]
        %s275 = sld [smem:[#allocation3]]
        %v276 = vstv %s275
        %v277 = vmul.f32 %v268, %v276
        %s278 = sld [smem:[#allocation3 + $0x1]]
        %v279 = vstv %s278
        %v280 = vmul.f32 %v270, %v279
        %v281 = vadd.f32 %v277, %v280
        %s282 = sld [smem:[#allocation3 + $0x2]]
        %v283 = vstv %s282
        %v284 = vmul.f32 %v272, %v283
        %v285 = vadd.f32 %v281, %v284
        %s286 = sld [smem:[#allocation3 + $0x3]]
        %v287 = vstv %s286
        %v288 = vmul.f32 %v274, %v287
        %v289 = vadd.f32 %v285, %v288
        %s290 = sld [smem:[#allocation6]]
        %v291 = vstv %s290
        %v292 = vadd.f32 %v289, %v291
        %v293 = vmax.f32 %v292, 0.0
        %s294 = sld [smem:[#allocation8]]
        %v295 = vstv %s294
        %v296 = vmul.f32 %v293, %v295
        %s297 = sld [smem:[#allocation3 + $0x80]]
        %v298 = vstv %s297
        %v299 = vmul.f32 %v268, %v298
        %s300 = sld [smem:[#allocation3 + $0x81]]
        %v301 = vstv %s300
        %v302 = vmul.f32 %v270, %v301
        %v303 = vadd.f32 %v299, %v302
        %s304 = sld [smem:[#allocation3 + $0x82]]
        %v305 = vstv %s304
        %v306 = vmul.f32 %v272, %v305
        %v307 = vadd.f32 %v303, %v306
        %s308 = sld [smem:[#allocation3 + $0x83]]
        %v309 = vstv %s308
        %v310 = vmul.f32 %v274, %v309
        %v311 = vadd.f32 %v307, %v310
        %s312 = sld [smem:[#allocation6 + $0x1]]
        %v313 = vstv %s312
        %v314 = vadd.f32 %v311, %v313
        %v315 = vmax.f32 %v314, 0.0
        %s316 = sld [smem:[#allocation8 + $0x1]]
        %v317 = vstv %s316
        %v318 = vmul.f32 %v315, %v317
        %v319 = vadd.f32 %v296, %v318
        %s320 = sld [smem:[#allocation3 + $0x100]]
        %v321 = vstv %s320
        %v322 = vmul.f32 %v268, %v321
        %s323 = sld [smem:[#allocation3 + $0x101]]
        %v324 = vstv %s323
        %v325 = vmul.f32 %v270, %v324
        %v326 = vadd.f32 %v322, %v325
        %s327 = sld [smem:[#allocation3 + $0x102]]
        %v328 = vstv %s327
        %v329 = vmul.f32 %v272, %v328
        %v330 = vadd.f32 %v326, %v329
        %s331 = sld [smem:[#allocation3 + $0x103]]
        %v332 = vstv %s331
        %v333 = vmul.f32 %v274, %v332
        %v334 = vadd.f32 %v330, %v333
        %s335 = sld [smem:[#allocation6 + $0x2]]
        %v336 = vstv %s335
        %v337 = vadd.f32 %v334, %v336
        %v338 = vmax.f32 %v337, 0.0
        %s339 = sld [smem:[#allocation8 + $0x2]]
        %v340 = vstv %s339
        %v341 = vmul.f32 %v338, %v340
        %v342 = vadd.f32 %v319, %v341
        %s343 = sld [smem:[#allocation3 + $0x180]]
        %v344 = vstv %s343
        %v345 = vmul.f32 %v268, %v344
        %s346 = sld [smem:[#allocation3 + $0x181]]
        %v347 = vstv %s346
        %v348 = vmul.f32 %v270, %v347
        %v349 = vadd.f32 %v345, %v348
        %s350 = sld [smem:[#allocation3 + $0x182]]
        %v351 = vstv %s350
        %v352 = vmul.f32 %v272, %v351
        %v353 = vadd.f32 %v349, %v352
        %s354 = sld [smem:[#allocation3 + $0x183]]
        %v355 = vstv %s354
        %v356 = vmul.f32 %v274, %v355
        %v357 = vadd.f32 %v353, %v356
        %s358 = sld [smem:[#allocation6 + $0x3]]
        %v359 = vstv %s358
        %v360 = vadd.f32 %v357, %v359
        %v361 = vmax.f32 %v360, 0.0
        %s362 = sld [smem:[#allocation8 + $0x3]]
        %v363 = vstv %s362
        %v364 = vmul.f32 %v361, %v363
        %v365 = vadd.f32 %v342, %v364
        %s366 = sld [smem:[#allocation3 + $0x200]]
        %v367 = vstv %s366
        %v368 = vmul.f32 %v268, %v367
        %s369 = sld [smem:[#allocation3 + $0x201]]
        %v370 = vstv %s369
        %v371 = vmul.f32 %v270, %v370
        %v372 = vadd.f32 %v368, %v371
        %s373 = sld [smem:[#allocation3 + $0x202]]
        %v374 = vstv %s373
        %v375 = vmul.f32 %v272, %v374
        %v376 = vadd.f32 %v372, %v375
        %s377 = sld [smem:[#allocation3 + $0x203]]
        %v378 = vstv %s377
        %v379 = vmul.f32 %v274, %v378
        %v380 = vadd.f32 %v376, %v379
        %s381 = sld [smem:[#allocation6 + $0x4]]
        %v382 = vstv %s381
        %v383 = vadd.f32 %v380, %v382
        %v384 = vmax.f32 %v383, 0.0
        %s385 = sld [smem:[#allocation8 + $0x4]]
        %v386 = vstv %s385
        %v387 = vmul.f32 %v384, %v386
        %v388 = vadd.f32 %v365, %v387
        %s389 = sld [smem:[#allocation3 + $0x280]]
        %v390 = vstv %s389
        %v391 = vmul.f32 %v268, %v390
        %s392 = sld [smem:[#allocation3 + $0x281]]
        %v393 = vstv %s392
        %v394 = vmul.f32 %v270, %v393
        %v395 = vadd.f32 %v391, %v394
        %s396 = sld [smem:[#allocation3 + $0x282]]
        %v397 = vstv %s396
        %v398 = vmul.f32 %v272, %v397
        %v399 = vadd.f32 %v395, %v398
        %s400 = sld [smem:[#allocation3 + $0x283]]
        %v401 = vstv %s400
        %v402 = vmul.f32 %v274, %v401
        %v403 = vadd.f32 %v399, %v402
        %s404 = sld [smem:[#allocation6 + $0x5]]
        %v405 = vstv %s404
        %v406 = vadd.f32 %v403, %v405
        %v407 = vmax.f32 %v406, 0.0
        %s408 = sld [smem:[#allocation8 + $0x5]]
        %v409 = vstv %s408
        %v410 = vmul.f32 %v407, %v409
        %v411 = vadd.f32 %v388, %v410
        %s412 = sld [smem:[#allocation3 + $0x300]]
        %v413 = vstv %s412
        %v414 = vmul.f32 %v268, %v413
        %s415 = sld [smem:[#allocation3 + $0x301]]
        %v416 = vstv %s415
        %v417 = vmul.f32 %v270, %v416
        %v418 = vadd.f32 %v414, %v417
        %s419 = sld [smem:[#allocation3 + $0x302]]
        %v420 = vstv %s419
        %v421 = vmul.f32 %v272, %v420
        %v422 = vadd.f32 %v418, %v421
        %s423 = sld [smem:[#allocation3 + $0x303]]
        %v424 = vstv %s423
        %v425 = vmul.f32 %v274, %v424
        %v426 = vadd.f32 %v422, %v425
        %s427 = sld [smem:[#allocation6 + $0x6]]
        %v428 = vstv %s427
        %v429 = vadd.f32 %v426, %v428
        %v430 = vmax.f32 %v429, 0.0
        %s431 = sld [smem:[#allocation8 + $0x6]]
        %v432 = vstv %s431
        %v433 = vmul.f32 %v430, %v432
        %v434 = vadd.f32 %v411, %v433
        %s435 = sld [smem:[#allocation3 + $0x380]]
        %v436 = vstv %s435
        %v437 = vmul.f32 %v268, %v436
        %s438 = sld [smem:[#allocation3 + $0x381]]
        %v439 = vstv %s438
        %v440 = vmul.f32 %v270, %v439
        %v441 = vadd.f32 %v437, %v440
        %s442 = sld [smem:[#allocation3 + $0x382]]
        %v443 = vstv %s442
        %v444 = vmul.f32 %v272, %v443
        %v445 = vadd.f32 %v441, %v444
        %s446 = sld [smem:[#allocation3 + $0x383]]
        %v447 = vstv %s446
        %v448 = vmul.f32 %v274, %v447
        %v449 = vadd.f32 %v445, %v448
        %s450 = sld [smem:[#allocation6 + $0x7]]
        %v451 = vstv %s450
        %v452 = vadd.f32 %v449, %v451
        %v453 = vmax.f32 %v452, 0.0
        %s454 = sld [smem:[#allocation8 + $0x7]]
        %v455 = vstv %s454
        %v456 = vmul.f32 %v453, %v455
        %v457 = vadd.f32 %v434, %v456
        %s458 = sld [smem:[#allocation3 + $0x400]]
        %v459 = vstv %s458
        %v460 = vmul.f32 %v268, %v459
        %s461 = sld [smem:[#allocation3 + $0x401]]
        %v462 = vstv %s461
        %v463 = vmul.f32 %v270, %v462
        %v464 = vadd.f32 %v460, %v463
        %s465 = sld [smem:[#allocation3 + $0x402]]
        %v466 = vstv %s465
        %v467 = vmul.f32 %v272, %v466
        %v468 = vadd.f32 %v464, %v467
        %s469 = sld [smem:[#allocation3 + $0x403]]
        %v470 = vstv %s469
        %v471 = vmul.f32 %v274, %v470
        %v472 = vadd.f32 %v468, %v471
        %s473 = sld [smem:[#allocation6 + $0x8]]
        %v474 = vstv %s473
        %v475 = vadd.f32 %v472, %v474
        %v476 = vmax.f32 %v475, 0.0
        %s477 = sld [smem:[#allocation8 + $0x8]]
        %v478 = vstv %s477
        %v479 = vmul.f32 %v476, %v478
        %v480 = vadd.f32 %v457, %v479
        %s481 = sld [smem:[#allocation3 + $0x480]]
        %v482 = vstv %s481
        %v483 = vmul.f32 %v268, %v482
        %s484 = sld [smem:[#allocation3 + $0x481]]
        %v485 = vstv %s484
        %v486 = vmul.f32 %v270, %v485
        %v487 = vadd.f32 %v483, %v486
        %s488 = sld [smem:[#allocation3 + $0x482]]
        %v489 = vstv %s488
        %v490 = vmul.f32 %v272, %v489
        %v491 = vadd.f32 %v487, %v490
        %s492 = sld [smem:[#allocation3 + $0x483]]
        %v493 = vstv %s492
        %v494 = vmul.f32 %v274, %v493
        %v495 = vadd.f32 %v491, %v494
        %s496 = sld [smem:[#allocation6 + $0x9]]
        %v497 = vstv %s496
        %v498 = vadd.f32 %v495, %v497
        %v499 = vmax.f32 %v498, 0.0
        %s500 = sld [smem:[#allocation8 + $0x9]]
        %v501 = vstv %s500
        %v502 = vmul.f32 %v499, %v501
        %v503 = vadd.f32 %v480, %v502
        %s504 = sld [smem:[#allocation3 + $0x500]]
        %v505 = vstv %s504
        %v506 = vmul.f32 %v268, %v505
        %s507 = sld [smem:[#allocation3 + $0x501]]
        %v508 = vstv %s507
        %v509 = vmul.f32 %v270, %v508
        %v510 = vadd.f32 %v506, %v509
        %s511 = sld [smem:[#allocation3 + $0x502]]
        %v512 = vstv %s511
        %v513 = vmul.f32 %v272, %v512
        %v514 = vadd.f32 %v510, %v513
        %s515 = sld [smem:[#allocation3 + $0x503]]
        %v516 = vstv %s515
        %v517 = vmul.f32 %v274, %v516
        %v518 = vadd.f32 %v514, %v517
        %s519 = sld [smem:[#allocation6 + $0xa]]
        %v520 = vstv %s519
        %v521 = vadd.f32 %v518, %v520
        %v522 = vmax.f32 %v521, 0.0
        %s523 = sld [smem:[#allocation8 + $0xa]]
        %v524 = vstv %s523
        %v525 = vmul.f32 %v522, %v524
        %v526 = vadd.f32 %v503, %v525
        %s527 = sld [smem:[#allocation3 + $0x580]]
        %v528 = vstv %s527
        %v529 = vmul.f32 %v268, %v528
        %s530 = sld [smem:[#allocation3 + $0x581]]
        %v531 = vstv %s530
        %v532 = vmul.f32 %v270, %v531
        %v533 = vadd.f32 %v529, %v532
        %s534 = sld [smem:[#allocation3 + $0x582]]
        %v535 = vstv %s534
        %v536 = vmul.f32 %v272, %v535
        %v537 = vadd.f32 %v533, %v536
        %s538 = sld [smem:[#allocation3 + $0x583]]
        %v539 = vstv %s538
        %v540 = vmul.f32 %v274, %v539
        %v541 = vadd.f32 %v537, %v540
        %s542 = sld [smem:[#allocation6 + $0xb]]
        %v543 = vstv %s542
        %v544 = vadd.f32 %v541, %v543
        %v545 = vmax.f32 %v544, 0.0
        %s546 = sld [smem:[#allocation8 + $0xb]]
        %v547 = vstv %s546
        %v548 = vmul.f32 %v545, %v547
        %v549 = vadd.f32 %v526, %v548
        %s550 = sld [smem:[#allocation3 + $0x600]]
        %v551 = vstv %s550
        %v552 = vmul.f32 %v268, %v551
        %s553 = sld [smem:[#allocation3 + $0x601]]
        %v554 = vstv %s553
        %v555 = vmul.f32 %v270, %v554
        %v556 = vadd.f32 %v552, %v555
        %s557 = sld [smem:[#allocation3 + $0x602]]
        %v558 = vstv %s557
        %v559 = vmul.f32 %v272, %v558
        %v560 = vadd.f32 %v556, %v559
        %s561 = sld [smem:[#allocation3 + $0x603]]
        %v562 = vstv %s561
        %v563 = vmul.f32 %v274, %v562
        %v564 = vadd.f32 %v560, %v563
        %s565 = sld [smem:[#allocation6 + $0xc]]
        %v566 = vstv %s565
        %v567 = vadd.f32 %v564, %v566
        %v568 = vmax.f32 %v567, 0.0
        %s569 = sld [smem:[#allocation8 + $0xc]]
        %v570 = vstv %s569
        %v571 = vmul.f32 %v568, %v570
        %v572 = vadd.f32 %v549, %v571
        %s573 = sld [smem:[#allocation3 + $0x680]]
        %v574 = vstv %s573
        %v575 = vmul.f32 %v268, %v574
        %s576 = sld [smem:[#allocation3 + $0x681]]
        %v577 = vstv %s576
        %v578 = vmul.f32 %v270, %v577
        %v579 = vadd.f32 %v575, %v578
        %s580 = sld [smem:[#allocation3 + $0x682]]
        %v581 = vstv %s580
        %v582 = vmul.f32 %v272, %v581
        %v583 = vadd.f32 %v579, %v582
        %s584 = sld [smem:[#allocation3 + $0x683]]
        %v585 = vstv %s584
        %v586 = vmul.f32 %v274, %v585
        %v587 = vadd.f32 %v583, %v586
        %s588 = sld [smem:[#allocation6 + $0xd]]
        %v589 = vstv %s588
        %v590 = vadd.f32 %v587, %v589
        %v591 = vmax.f32 %v590, 0.0
        %s592 = sld [smem:[#allocation8 + $0xd]]
        %v593 = vstv %s592
        %v594 = vmul.f32 %v591, %v593
        %v595 = vadd.f32 %v572, %v594
        %s596 = sld [smem:[#allocation3 + $0x700]]
        %v597 = vstv %s596
        %v598 = vmul.f32 %v268, %v597
        %s599 = sld [smem:[#allocation3 + $0x701]]
        %v600 = vstv %s599
        %v601 = vmul.f32 %v270, %v600
        %v602 = vadd.f32 %v598, %v601
        %s603 = sld [smem:[#allocation3 + $0x702]]
        %v604 = vstv %s603
        %v605 = vmul.f32 %v272, %v604
        %v606 = vadd.f32 %v602, %v605
        %s607 = sld [smem:[#allocation3 + $0x703]]
        %v608 = vstv %s607
        %v609 = vmul.f32 %v274, %v608
        %v610 = vadd.f32 %v606, %v609
        %s611 = sld [smem:[#allocation6 + $0xe]]
        %v612 = vstv %s611
        %v613 = vadd.f32 %v610, %v612
        %v614 = vmax.f32 %v613, 0.0
        %s615 = sld [smem:[#allocation8 + $0xe]]
        %v616 = vstv %s615
        %v617 = vmul.f32 %v614, %v616
        %v618 = vadd.f32 %v595, %v617
        %s619 = sld [smem:[#allocation3 + $0x780]]
        %v620 = vstv %s619
        %v621 = vmul.f32 %v268, %v620
        %s622 = sld [smem:[#allocation3 + $0x781]]
        %v623 = vstv %s622
        %v624 = vmul.f32 %v270, %v623
        %v625 = vadd.f32 %v621, %v624
        %s626 = sld [smem:[#allocation3 + $0x782]]
        %v627 = vstv %s626
        %v628 = vmul.f32 %v272, %v627
        %v629 = vadd.f32 %v625, %v628
        %s630 = sld [smem:[#allocation3 + $0x783]]
        %v631 = vstv %s630
        %v632 = vmul.f32 %v274, %v631
        %v633 = vadd.f32 %v629, %v632
        %s634 = sld [smem:[#allocation6 + $0xf]]
        %v635 = vstv %s634
        %v636 = vadd.f32 %v633, %v635
        %v637 = vmax.f32 %v636, 0.0
        %s638 = sld [smem:[#allocation8 + $0xf]]
        %v639 = vstv %s638
        %v640 = vmul.f32 %v637, %v639
        %v641 = vadd.f32 %v618, %v640
        %s642 = sld [smem:[#allocation3 + $0x800]]
        %v643 = vstv %s642
        %v644 = vmul.f32 %v268, %v643
        %s645 = sld [smem:[#allocation3 + $0x801]]
        %v646 = vstv %s645
        %v647 = vmul.f32 %v270, %v646
        %v648 = vadd.f32 %v644, %v647
        %s649 = sld [smem:[#allocation3 + $0x802]]
        %v650 = vstv %s649
        %v651 = vmul.f32 %v272, %v650
        %v652 = vadd.f32 %v648, %v651
        %s653 = sld [smem:[#allocation3 + $0x803]]
        %v654 = vstv %s653
        %v655 = vmul.f32 %v274, %v654
        %v656 = vadd.f32 %v652, %v655
        %s657 = sld [smem:[#allocation6 + $0x10]]
        %v658 = vstv %s657
        %v659 = vadd.f32 %v656, %v658
        %v660 = vmax.f32 %v659, 0.0
        %s661 = sld [smem:[#allocation8 + $0x10]]
        %v662 = vstv %s661
        %v663 = vmul.f32 %v660, %v662
        %v664 = vadd.f32 %v641, %v663
        %s665 = sld [smem:[#allocation3 + $0x880]]
        %v666 = vstv %s665
        %v667 = vmul.f32 %v268, %v666
        %s668 = sld [smem:[#allocation3 + $0x881]]
        %v669 = vstv %s668
        %v670 = vmul.f32 %v270, %v669
        %v671 = vadd.f32 %v667, %v670
        %s672 = sld [smem:[#allocation3 + $0x882]]
        %v673 = vstv %s672
        %v674 = vmul.f32 %v272, %v673
        %v675 = vadd.f32 %v671, %v674
        %s676 = sld [smem:[#allocation3 + $0x883]]
        %v677 = vstv %s676
        %v678 = vmul.f32 %v274, %v677
        %v679 = vadd.f32 %v675, %v678
        %s680 = sld [smem:[#allocation6 + $0x11]]
        %v681 = vstv %s680
        %v682 = vadd.f32 %v679, %v681
        %v683 = vmax.f32 %v682, 0.0
        %s684 = sld [smem:[#allocation8 + $0x11]]
        %v685 = vstv %s684
        %v686 = vmul.f32 %v683, %v685
        %v687 = vadd.f32 %v664, %v686
        %s688 = sld [smem:[#allocation3 + $0x900]]
        %v689 = vstv %s688
        %v690 = vmul.f32 %v268, %v689
        %s691 = sld [smem:[#allocation3 + $0x901]]
        %v692 = vstv %s691
        %v693 = vmul.f32 %v270, %v692
        %v694 = vadd.f32 %v690, %v693
        %s695 = sld [smem:[#allocation3 + $0x902]]
        %v696 = vstv %s695
        %v697 = vmul.f32 %v272, %v696
        %v698 = vadd.f32 %v694, %v697
        %s699 = sld [smem:[#allocation3 + $0x903]]
        %v700 = vstv %s699
        %v701 = vmul.f32 %v274, %v700
        %v702 = vadd.f32 %v698, %v701
        %s703 = sld [smem:[#allocation6 + $0x12]]
        %v704 = vstv %s703
        %v705 = vadd.f32 %v702, %v704
        %v706 = vmax.f32 %v705, 0.0
        %s707 = sld [smem:[#allocation8 + $0x12]]
        %v708 = vstv %s707
        %v709 = vmul.f32 %v706, %v708
        %v710 = vadd.f32 %v687, %v709
        %s711 = sld [smem:[#allocation3 + $0x980]]
        %v712 = vstv %s711
        %v713 = vmul.f32 %v268, %v712
        %s714 = sld [smem:[#allocation3 + $0x981]]
        %v715 = vstv %s714
        %v716 = vmul.f32 %v270, %v715
        %v717 = vadd.f32 %v713, %v716
        %s718 = sld [smem:[#allocation3 + $0x982]]
        %v719 = vstv %s718
        %v720 = vmul.f32 %v272, %v719
        %v721 = vadd.f32 %v717, %v720
        %s722 = sld [smem:[#allocation3 + $0x983]]
        %v723 = vstv %s722
        %v724 = vmul.f32 %v274, %v723
        %v725 = vadd.f32 %v721, %v724
        %s726 = sld [smem:[#allocation6 + $0x13]]
        %v727 = vstv %s726
        %v728 = vadd.f32 %v725, %v727
        %v729 = vmax.f32 %v728, 0.0
        %s730 = sld [smem:[#allocation8 + $0x13]]
        %v731 = vstv %s730
        %v732 = vmul.f32 %v729, %v731
        %v733 = vadd.f32 %v710, %v732
        %s734 = sld [smem:[#allocation2]]
        %v735 = vstv %s734
        %v736 = vadd.f32 %v733, %v735
        %v737 = vlaneseq
        %vm738 = vcmp.ge.s32.totalorder %v737, 0
        %vm739 = vcmp.lt.s32.totalorder %v737, 256
        %vm740 = vmand %vm738, %vm739
        %741 = vst.msk [vmem:[%s260] sm:$0x3] %vm740, %v736
        %s742 = sand.u32 %s140, 1
        %s743 = scalar_lea.sflag [#allocation4], %s742
        %s744 = sand.u32 %s140, 1
        %s745 = smul.addr %s744, 2
        %s746 = scalar_lea.vmem [#allocation9], %s745
        // Predicated region
        $region53: #{tpu_custom_call.1} parent=39 // pred_check
          %p747 = pneg %p150
        $region54: #{tpu_custom_call.1} parent=39 // pred_check_branch
          %749 = sbr.rel (%p747) target = $region56
        $region55: #{tpu_custom_call.1} parent=39 // pred_region
          %s750 = smul.u32 2, %s22
          %s752 = ssub.s32 32, 32
          %753 = vsyncadd %s743, %s752
          %s754 = smul.addr %s750, 16
          %s755 = scalar_lea.hbm %s5, %s754
          %s757 = sshll.u32 %s746, 4
          %s758 = int_to_ptr.vmem [resolvable:$true] %s757
          %760 = dma.vmem_to_hbm [thread:$0]  %s758, 32, %s755, %s743
        $region56: #{tpu_custom_call.1} parent=39 // pred_fallthru
          _
      $region40: #{tpu_custom_call.1} parent=5 // pred_fallthru
        _
      %p761 = scmp.le.s32.totalorder 2, %s17
      // Predicated region
      $region57: #{tpu_custom_call.1} parent=5 // pred_check
        %p762 = pneg %p761
      $region58: #{tpu_custom_call.1} parent=5 // pred_check_branch
        %764 = sbr.rel (%p762) target = $region60
      $region59: #{tpu_custom_call.1} parent=5 // pred_region
        %s765 = ssub.s32 %s17, 2
        // Predicated region
        $region61: #{tpu_custom_call.1} parent=59 // pred_check
          %p766 = pneg %p156
        $region62: #{tpu_custom_call.1} parent=59 // pred_check_branch
          %768 = sbr.rel (%p766) target = $region64
        $region63: #{tpu_custom_call.1} parent=59 // pred_region
          %s769 = sand.u32 %s141, 1
          %s770 = scalar_lea.sflag [#allocation4], %s769
          %s771 = sand.u32 %s141, 1
          %s772 = smul.addr %s771, 2
          %s773 = scalar_lea.vmem [#allocation9], %s772
          %774 = dma.done %s770, 32
        $region64: #{tpu_custom_call.1} parent=59 // pred_fallthru
          _
      $region60: #{tpu_custom_call.1} parent=5 // pred_fallthru
        _
    $region6: #{tpu_custom_call.1} parent=1 // loop_footer
      %s21 = sadd.s32 1, %s17
    $region7: #{tpu_custom_call.1} parent=1 // loop_footer_branch
      %16 = sbr.rel target = $region3
    $region8: #{tpu_custom_call.1} parent=1 // loop_exit
      _
    %775 = vsyncpa [#allocation4], 1
    %s776 = scalar_lea.sflag [#allocation4], 1
    %777 = vsyncpa %s776, 1
    %778 = vsyncpa [#allocation5], 1
    %s779 = scalar_lea.sflag [#allocation5], 1
    %780 = vsyncpa %s779, 1
    %781 = vsyncpa [#allocation7], 1

</llo_original>
